<compile_context>
chip_gen: v5e
topology: v5e:2x2
jax: 0.10.0
libtpu: 0.0.40
codegen_flags: <defaults>
</compile_context>

<pallas_src>
import functools

import numpy as np
import jax
import jax.numpy as jnp
from jax import lax
from jax.experimental import pallas as pl
from jax.experimental.pallas import tpu as pltpu

_LANE = 128  # per-head padded lane stride (vreg lane width)


# ----------------------------- shared helpers ------------------------------ #

def _layer_norm(v, gamma, beta, eps=1e-5):
    mu = jnp.mean(v, axis=-1, keepdims=True)
    var = jnp.mean((v - mu) ** 2, axis=-1, keepdims=True)
    return (v - mu) * lax.rsqrt(var + eps) * gamma + beta


# ----------------------------- Pallas kernel ------------------------------- #

def encoder_layer_kernel(
    x_ref,      # [1, N, D]            node features for this grid step
    cbi_ref,    # [1, H+2, N, N]       rows 0..H-1 = c_h, row H = b, row H+1 = ind
    wqkv_ref,   # [D, 3*H*128]         packed Q|K|V' weights, 128-lane per head
    bqkv_ref,   # [1, 3*H*128]         packed Q|K|V' biases
    wff_ref,    # [D, D]               feed-forward weight
    vec_ref,    # [6, D]               rows: g1, be1, g2, be2, bo, bff
    out_ref,    # [1, N, D]
    *, n_heads, node_dim,
):
    d = node_dim
    x = x_ref[0]                                   # [N, D]
    n = x.shape[0]

    b_sp = cbi_ref[0, n_heads]                     # [N, N] spatial encoding
    ind = cbi_ref[0, n_heads + 1]                  # [N, N] same-graph indicator
    mask_mult = jnp.where(ind == 1.0, 1.0, -1000000.0)

    g1, be1 = vec_ref[0:1, :], vec_ref[1:2, :]
    g2, be2 = vec_ref[2:3, :], vec_ref[3:4, :]
    bo, bff = vec_ref[4:5, :], vec_ref[5:6, :]

    # h'(l) = MHA(LN(h(l-1))) + h(l-1)
    xn1 = _layer_norm(x, g1, be1)

    # One fused, lane-dense QKV' projection.  Each head's group is padded to a
    # 128-lane stride, so every slice below starts on a 128-lane boundary.
    # Q is pre-scaled by 1/sqrt(d); V' has Wo folded in (Wv_h @ Wo_h).
    qkv = (jnp.dot(xn1, wqkv_ref[...], preferred_element_type=jnp.float32)
           + bqkv_ref[...])                        # [N, 3*H*128]

    att = jnp.zeros((n, _LANE), jnp.float32)       # head outputs accumulate here
    for h in range(n_heads):                       # static python loop, H small
        q = qkv[:, h * _LANE:(h + 1) * _LANE]
        k = qkv[:, (n_heads + h) * _LANE:(n_heads + h + 1) * _LANE]
        v = qkv[:, (2 * n_heads + h) * _LANE:(2 * n_heads + h + 1) * _LANE]

        # q @ k.T — zero-padded lanes contribute nothing to the contraction.
        a = lax.dot_general(q, k, (((1,), (1,)), ((), ())),
                            preferred_element_type=jnp.float32)       # [N, N]
        a = (a + cbi_ref[0, h] + b_sp) * mask_mult

        a_max = jnp.max(a, axis=-1, keepdims=True)
        e = jnp.exp(a - a_max)
        inv = pl.reciprocal(jnp.sum(e, axis=-1, keepdims=True), approx=True)
        sm = (e * inv) * ind

        # sm @ (v @ Wo_h) accumulated in a register (no scratch, no concat).
        att = att + jnp.dot(sm, v, preferred_element_type=jnp.float32)

    att_d = att[:, :d] + bo                        # single offset-0 narrowing
    x_prime = att_d + x

    # h(l) = FFN(LN(h'(l))) + h'(l)
    xn2 = _layer_norm(x_prime, g2, be2)
    out_ref[0] = (jnp.dot(xn2, wff_ref[...], preferred_element_type=jnp.float32)
                  + bff + x_prime)


# --------------------------- host-side (one-time) --------------------------- #

def prepare_params(params):
    """Packs weights ONCE (not in the per-forward hot path)."""
    h, d, _ = params["wq"].shape
    scale = 1.0 / (d ** 0.5)

    wo_h = params["wo"].reshape(h, d, d)                  # per-head rows of Wo
    wq = params["wq"] * scale                             # fold 1/sqrt(d) into Q
    bq = params["bq"] * scale
    wvo = jnp.einsum("hij,hjk->hik", params["wv"], wo_h)  # fold Wo into V
    bvo = jnp.einsum("hij,hjk->hik", params["bv"], wo_h)

    def pack_w(w):   # [H, D, Dout] -> [D, H*128], zero-padded per head
        wp = jnp.pad(w, ((0, 0), (0, 0), (0, _LANE - d)))
        return jnp.transpose(wp, (1, 0, 2)).reshape(d, h * _LANE)

    def pack_b(bv):  # [H, 1, Dout] -> [1, H*128]
        bp = jnp.pad(bv, ((0, 0), (0, 0), (0, _LANE - d)))
        return bp.reshape(1, h * _LANE)

    w_qkv = jnp.concatenate([pack_w(wq), pack_w(params["wk"]), pack_w(wvo)], axis=1)
    b_qkv = jnp.concatenate([pack_b(bq), pack_b(params["bk"]), pack_b(bvo)], axis=1)
    vec = jnp.concatenate([params["g1"], params["be1"], params["g2"],
                           params["be2"], params["bo"], params["bff"]], axis=0)
    return {"w_qkv": w_qkv, "b_qkv": b_qkv, "wff": params["wff"], "vec": vec}


@jax.jit
def graphormer_encoder_layer(x, b, c, ind, packed):
    """x:[B,N,D], b:[B,N,N], c:[B,H,N,N], ind:[B,N,N], packed from prepare_params."""
    bsz, n, d = x.shape
    h = c.shape[1]

    # Merge c, b, ind into one slab (one DMA descriptor per grid step); the c+b
    # add and the mask select happen in-kernel.  Under jit this fuses with the
    # pallas_call instead of being separate eager dispatches.
    cbi = jnp.concatenate(
        [c, b[:, None, :, :], ind[:, None, :, :]], axis=1).astype(jnp.float32)

    kernel = functools.partial(encoder_layer_kernel, n_heads=h, node_dim=d)

    flops = bsz * (2 * n * d * (3 * h * _LANE)
                   + h * (2 * n * _LANE * n + 2 * n * n * _LANE)
                   + 2 * n * d * d)
    transcendentals = bsz * (h * n * n + 2 * n)
    bytes_accessed = 4 * (2 * x.size + cbi.size
                          + packed["w_qkv"].size + packed["b_qkv"].size
                          + packed["wff"].size + packed["vec"].size)

    wshape = packed["w_qkv"].shape
    bshape = packed["b_qkv"].shape
    fshape = packed["wff"].shape
    vshape = packed["vec"].shape

    return pl.pallas_call(
        kernel,
        out_shape=jax.ShapeDtypeStruct((bsz, n, d), jnp.float32),
        grid=(bsz,),
        in_specs=[
            pl.BlockSpec((1, n, d), lambda g: (g, 0, 0)),
            pl.BlockSpec((1, h + 2, n, n), lambda g: (g, 0, 0, 0)),
            pl.BlockSpec(wshape, lambda g: (0, 0)),      # resident weights
            pl.BlockSpec(bshape, lambda g: (0, 0)),
            pl.BlockSpec(fshape, lambda g: (0, 0)),
            pl.BlockSpec(vshape, lambda g: (0, 0)),
        ],
        out_specs=pl.BlockSpec((1, n, d), lambda g: (g, 0, 0)),
        compiler_params=pltpu.CompilerParams(dimension_semantics=("parallel",)),
        cost_estimate=pl.CostEstimate(flops=flops,
                                      bytes_accessed=bytes_accessed,
                                      transcendentals=transcendentals),
    )(x, cbi, packed["w_qkv"], packed["b_qkv"], packed["wff"], packed["vec"])


# --------------------------- glue: edge encoding ---------------------------- #

def edge_encoding_c(edge_paths, edge_attr, edge_vectors, n_nodes, max_path_distance):
    """Replicates EdgeEncoding.forward per head -> c[h, src, dst]."""
    ea = np.asarray(edge_attr)                       # [E, edge_dim]
    ev = np.asarray(edge_vectors)                    # [H, P, edge_dim]
    n_heads = ev.shape[0]
    c = np.zeros((n_heads, n_nodes, n_nodes), dtype=np.float32)
    for src in edge_paths:
        for dst in edge_paths[src]:
            path_ij = edge_paths[src][dst][:max_path_distance]
            length = len(path_ij)
            if length == 0:
                continue  # mean of empty -> nan -> nan_to_num -> 0
            gathered = ea[np.array(path_ij)]         # [L, edge_dim]
            for hh in range(n_heads):
                dots = (ev[hh, :length] * gathered).sum(-1)
                c[hh, src, dst] = dots.mean()
    return jnp.asarray(c)


def ptr_to_indicator(ptr, n_nodes):
    ind = np.zeros((n_nodes, n_nodes), dtype=np.float32)
    if ptr is None:
        ind[...] = 1.0
    else:
        for i in range(len(ptr) - 1):
            ind[ptr[i]:ptr[i + 1], ptr[i]:ptr[i + 1]] = 1.0
    return jnp.asarray(ind)


# ------------------------------ JAX reference ------------------------------- #

def reference(x, b, c, ind, p):
    mneg = jnp.where(ind == 1.0, 1.0, -1000000.0)
    xn1 = _layer_norm(x, p["g1"], p["be1"])
    n_heads = p["wq"].shape[0]
    d = x.shape[1]
    heads = []
    for h in range(n_heads):
        q = xn1 @ p["wq"][h] + p["bq"][h]
        k = xn1 @ p["wk"][h] + p["bk"][h]
        v = xn1 @ p["wv"][h] + p["bv"][h]
        a = (q @ k.T) / d ** 0.5
        a = (a + b + c[h]) * mneg
        sm = jax.nn.softmax(a, axis=-1) * ind
        heads.append(sm @ v)
    att = jnp.concatenate(heads, -1) @ p["wo"] + p["bo"]
    xp = att + x
    return _layer_norm(xp, p["g2"], p["be2"]) @ p["wff"] + p["bff"] + xp


# ----------------------------------- main ----------------------------------- #

if __name__ == "__main__":
    B = 4             # batches of graphs -> parallel grid axis
    N = 16            # nodes per batch (two graphs of 8, masked via ptr)
    D = 32            # node_dim
    EDGE_DIM = 8
    H = 4             # n_heads
    P = 5             # max_path_distance
    E = 20            # edges per batch

    key = jax.random.PRNGKey(0)
    ks = jax.random.split(key, 24)
    s = 0.1

    x_all = jax.random.normal(ks[0], (B, N, D), dtype=jnp.float32)
    edge_attr_all = jax.random.normal(ks[1], (B, E, EDGE_DIM), dtype=jnp.float32)
    b_all = jax.random.normal(ks[2], (B, N, N), dtype=jnp.float32) * s

    params = {
        "wq": jax.random.normal(ks[3], (H, D, D), dtype=jnp.float32) * s,
        "bq": jax.random.normal(ks[4], (H, 1, D), dtype=jnp.float32) * s,
        "wk": jax.random.normal(ks[5], (H, D, D), dtype=jnp.float32) * s,
        "bk": jax.random.normal(ks[6], (H, 1, D), dtype=jnp.float32) * s,
        "wv": jax.random.normal(ks[7], (H, D, D), dtype=jnp.float32) * s,
        "bv": jax.random.normal(ks[8], (H, 1, D), dtype=jnp.float32) * s,
        "wo": jax.random.normal(ks[9], (H * D, D), dtype=jnp.float32) * s,
        "bo": jax.random.normal(ks[10], (1, D), dtype=jnp.float32) * s,
        "g1": 1.0 + jax.random.normal(ks[11], (1, D), dtype=jnp.float32) * s,
        "be1": jax.random.normal(ks[12], (1, D), dtype=jnp.float32) * s,
        "g2": 1.0 + jax.random.normal(ks[13], (1, D), dtype=jnp.float32) * s,
        "be2": jax.random.normal(ks[14], (1, D), dtype=jnp.float32) * s,
        "wff": jax.random.normal(ks[15], (D, D), dtype=jnp.float32) * s,
        "bff": jax.random.normal(ks[16], (1, D), dtype=jnp.float32) * s,
    }
    # per-head EdgeEncoding.edge_vector parameters
    edge_vectors = jax.random.normal(ks[17], (H, P, EDGE_DIM), dtype=jnp.float32)

    # deterministic synthetic edge_paths per batch: dict[src][dst] -> edge idxs
    ptr = [0, 8, 16]
    ind = ptr_to_indicator(ptr, N)                                   # [N, N]
    ind_all = jnp.broadcast_to(ind, (B, N, N))

    c_list = []
    for bi in range(B):
        rng = np.random.default_rng(bi)
        edge_paths = {}
        for g_start, g_end in [(0, 8), (8, 16)]:
            for src in range(g_start, g_end):
                edge_paths.setdefault(src, {})
                for dst in range(g_start, g_end):
                    if src == dst:
                        continue
                    length = int(rng.integers(1, P + 2))   # some exceed P -> truncated
                    edge_paths[src][dst] = [int(e) for e in rng.integers(0, E, size=length)]
        c_list.append(edge_encoding_c(edge_paths, edge_attr_all[bi],
                                      edge_vectors, N, P))
    c_all = jnp.stack(c_list, axis=0)                                # [B, H, N, N]

    # One-time weight packing (outside the per-forward hot path).
    packed = prepare_params(params)

    out = graphormer_encoder_layer(x_all, b_all, c_all, ind_all, packed)
    out = jax.block_until_ready(out)

    ref = jnp.stack([reference(x_all[bi], b_all[bi], c_all[bi], ind, params)
                     for bi in range(B)], axis=0)
    np.testing.assert_allclose(np.asarray(out), np.asarray(ref),
                               rtol=2e-3, atol=2e-3)

    print("KERNEL_OK")
</pallas_src>

<mosaic_0001>
module attributes {stable_mosaic.version = 11 : i64} {
  func.func @encoder_layer_kernel(%arg0: i32, %arg1: memref<1x16x32xf32, #tpu.memory_space<vmem>>, %arg2: memref<1x6x16x16xf32, #tpu.memory_space<vmem>>, %arg3: memref<32x1536xf32, #tpu.memory_space<vmem>>, %arg4: memref<1x1536xf32, #tpu.memory_space<vmem>>, %arg5: memref<32x32xf32, #tpu.memory_space<vmem>>, %arg6: memref<6x32xf32, #tpu.memory_space<vmem>>, %arg7: memref<1x16x32xf32, #tpu.memory_space<vmem>>) attributes {dimension_semantics = [#tpu.dimension_semantics<parallel>], iteration_bounds = array<i64: 4>, scalar_prefetch = 0 : i64, scratch_operands = 0 : i64, tpu.core_type = #tpu.core_type<tc>, window_params = [{transform_indices = @transform_0, window_bounds = array<i64: 1, 16, 32>}, {transform_indices = @transform_1, window_bounds = array<i64: 1, 6, 16, 16>}, {pipeline_mode = #tpu.pipeline_mode<synchronous>, transform_indices = @transform_2, window_bounds = array<i64: 32, 1536>}, {pipeline_mode = #tpu.pipeline_mode<synchronous>, transform_indices = @transform_3, window_bounds = array<i64: 1, 1536>}, {pipeline_mode = #tpu.pipeline_mode<synchronous>, transform_indices = @transform_4, window_bounds = array<i64: 32, 32>}, {pipeline_mode = #tpu.pipeline_mode<synchronous>, transform_indices = @transform_5, window_bounds = array<i64: 6, 32>}, {transform_indices = @transform_6, window_bounds = array<i64: 1, 16, 32>}]} {
    %c0 = arith.constant 0 : index
    %c0_0 = arith.constant 0 : index
    %c0_1 = arith.constant 0 : index
    %0 = vector.load %arg1[%c0, %c0_0, %c0_1] : memref<1x16x32xf32, #tpu.memory_space<vmem>>, vector<1x16x32xf32>
    %1 = vector.shape_cast %0 : vector<1x16x32xf32> to vector<16x32xf32>
    %c0_2 = arith.constant 0 : index
    %c4 = arith.constant 4 : index
    %c0_3 = arith.constant 0 : index
    %c0_4 = arith.constant 0 : index
    %2 = vector.load %arg2[%c0_2, %c4, %c0_3, %c0_4] : memref<1x6x16x16xf32, #tpu.memory_space<vmem>>, vector<1x1x16x16xf32>
    %3 = vector.shape_cast %2 : vector<1x1x16x16xf32> to vector<16x16xf32>
    %c0_5 = arith.constant 0 : index
    %c5 = arith.constant 5 : index
    %c0_6 = arith.constant 0 : index
    %c0_7 = arith.constant 0 : index
    %4 = vector.load %arg2[%c0_5, %c5, %c0_6, %c0_7] : memref<1x6x16x16xf32, #tpu.memory_space<vmem>>, vector<1x1x16x16xf32>
    %5 = vector.shape_cast %4 : vector<1x1x16x16xf32> to vector<16x16xf32>
    %cst = arith.constant 1.000000e+00 : f32
    %6 = vector.broadcast %cst : f32 to vector<16x16xf32>
    %7 = arith.cmpf oeq, %5, %6 : vector<16x16xf32>
    %cst_8 = arith.constant 1.000000e+00 : f32
    %cst_9 = arith.constant -1.000000e+06 : f32
    %8 = vector.broadcast %cst_8 : f32 to vector<16x16xf32>
    %9 = vector.broadcast %cst_9 : f32 to vector<16x16xf32>
    %10 = arith.select %7, %8, %9 : vector<16x16xi1>, vector<16x16xf32>
    %c0_10 = arith.constant 0 : index
    %c0_11 = arith.constant 0 : index
    %11 = vector.load %arg6[%c0_10, %c0_11] : memref<6x32xf32, #tpu.memory_space<vmem>>, vector<1x32xf32>
    %c1 = arith.constant 1 : index
    %c0_12 = arith.constant 0 : index
    %12 = vector.load %arg6[%c1, %c0_12] : memref<6x32xf32, #tpu.memory_space<vmem>>, vector<1x32xf32>
    %c2 = arith.constant 2 : index
    %c0_13 = arith.constant 0 : index
    %13 = vector.load %arg6[%c2, %c0_13] : memref<6x32xf32, #tpu.memory_space<vmem>>, vector<1x32xf32>
    %c3 = arith.constant 3 : index
    %c0_14 = arith.constant 0 : index
    %14 = vector.load %arg6[%c3, %c0_14] : memref<6x32xf32, #tpu.memory_space<vmem>>, vector<1x32xf32>
    %c4_15 = arith.constant 4 : index
    %c0_16 = arith.constant 0 : index
    %15 = vector.load %arg6[%c4_15, %c0_16] : memref<6x32xf32, #tpu.memory_space<vmem>>, vector<1x32xf32>
    %c5_17 = arith.constant 5 : index
    %c0_18 = arith.constant 0 : index
    %16 = vector.load %arg6[%c5_17, %c0_18] : memref<6x32xf32, #tpu.memory_space<vmem>>, vector<1x32xf32>
    %cst_19 = arith.constant dense<0.000000e+00> : vector<16xf32>
    %17 = vector.multi_reduction <add>, %1, %cst_19 [1] : vector<16x32xf32> to vector<16xf32>
    %18 = vector.shape_cast %17 : vector<16xf32> to vector<16x1xf32>
    %cst_20 = arith.constant 3.200000e+01 : f32
    %19 = vector.broadcast %cst_20 : f32 to vector<16x1xf32>
    %20 = arith.divf %18, %19 : vector<16x1xf32>
    %21 = vector.broadcast %20 : vector<16x1xf32> to vector<16x32xf32>
    %22 = arith.subf %1, %21 : vector<16x32xf32>
    %23 = arith.mulf %22, %22 : vector<16x32xf32>
    %cst_21 = arith.constant dense<0.000000e+00> : vector<16xf32>
    %24 = vector.multi_reduction <add>, %23, %cst_21 [1] : vector<16x32xf32> to vector<16xf32>
    %25 = vector.shape_cast %24 : vector<16xf32> to vector<16x1xf32>
    %cst_22 = arith.constant 3.200000e+01 : f32
    %26 = vector.broadcast %cst_22 : f32 to vector<16x1xf32>
    %27 = arith.divf %25, %26 : vector<16x1xf32>
    %28 = vector.broadcast %20 : vector<16x1xf32> to vector<16x32xf32>
    %29 = arith.subf %1, %28 : vector<16x32xf32>
    %cst_23 = arith.constant 9.99999974E-6 : f32
    %30 = vector.broadcast %cst_23 : f32 to vector<16x1xf32>
    %31 = arith.addf %27, %30 : vector<16x1xf32>
    %32 = math.rsqrt %31 : vector<16x1xf32>
    %33 = vector.broadcast %32 : vector<16x1xf32> to vector<16x32xf32>
    %34 = arith.mulf %29, %33 : vector<16x32xf32>
    %35 = vector.broadcast %11 : vector<1x32xf32> to vector<16x32xf32>
    %36 = arith.mulf %34, %35 : vector<16x32xf32>
    %37 = vector.broadcast %12 : vector<1x32xf32> to vector<16x32xf32>
    %38 = arith.addf %36, %37 : vector<16x32xf32>
    %c0_24 = arith.constant 0 : index
    %c0_25 = arith.constant 0 : index
    %39 = vector.load %arg3[%c0_24, %c0_25] : memref<32x1536xf32, #tpu.memory_space<vmem>>, vector<32x1536xf32>
    %cst_26 = arith.constant dense<0.000000e+00> : vector<16x1536xf32>
    %40 = tpu.matmul %38, %39, %cst_26 {dimension_numbers = #tpu.dot_dimension_numbers<[1], [0], [0], [1], [0, 0, 1, 1], [], []>} : vector<16x32xf32>, vector<32x1536xf32>, vector<16x1536xf32> -> vector<16x1536xf32>
    %c0_27 = arith.constant 0 : index
    %c0_28 = arith.constant 0 : index
    %41 = vector.load %arg4[%c0_27, %c0_28] : memref<1x1536xf32, #tpu.memory_space<vmem>>, vector<1x1536xf32>
    %42 = vector.broadcast %41 : vector<1x1536xf32> to vector<16x1536xf32>
    %43 = arith.addf %40, %42 : vector<16x1536xf32>
    %cst_29 = arith.constant 0.000000e+00 : f32
    %44 = vector.broadcast %cst_29 : f32 to vector<16x128xf32>
    %45 = vector.extract_strided_slice %43 {offsets = [0, 0], sizes = [16, 128], strides = [1, 1]} : vector<16x1536xf32> to vector<16x128xf32>
    %46 = vector.extract_strided_slice %43 {offsets = [0, 512], sizes = [16, 128], strides = [1, 1]} : vector<16x1536xf32> to vector<16x128xf32>
    %47 = vector.extract_strided_slice %43 {offsets = [0, 1024], sizes = [16, 128], strides = [1, 1]} : vector<16x1536xf32> to vector<16x128xf32>
    %cst_30 = arith.constant dense<0.000000e+00> : vector<16x16xf32>
    %48 = tpu.matmul %45, %46, %cst_30 {dimension_numbers = #tpu.dot_dimension_numbers<[1], [1], [0], [0], [0, 0, 1, 0], [], []>} : vector<16x128xf32>, vector<16x128xf32>, vector<16x16xf32> -> vector<16x16xf32>
    %c0_31 = arith.constant 0 : index
    %c0_32 = arith.constant 0 : index
    %c0_33 = arith.constant 0 : index
    %c0_34 = arith.constant 0 : index
    %49 = vector.load %arg2[%c0_31, %c0_32, %c0_33, %c0_34] : memref<1x6x16x16xf32, #tpu.memory_space<vmem>>, vector<1x1x16x16xf32>
    %50 = vector.shape_cast %49 : vector<1x1x16x16xf32> to vector<16x16xf32>
    %51 = arith.addf %48, %50 : vector<16x16xf32>
    %52 = arith.addf %51, %3 : vector<16x16xf32>
    %53 = arith.mulf %52, %10 : vector<16x16xf32>
    %cst_35 = arith.constant dense<0xFF800000> : vector<16xf32>
    %54 = vector.multi_reduction <maximumf>, %53, %cst_35 [1] : vector<16x16xf32> to vector<16xf32>
    %55 = vector.shape_cast %54 : vector<16xf32> to vector<16x1xf32>
    %56 = vector.broadcast %55 : vector<16x1xf32> to vector<16x16xf32>
    %57 = arith.subf %53, %56 : vector<16x16xf32>
    %58 = math.exp %57 : vector<16x16xf32>
    %cst_36 = arith.constant dense<0.000000e+00> : vector<16xf32>
    %59 = vector.multi_reduction <add>, %58, %cst_36 [1] : vector<16x16xf32> to vector<16xf32>
    %60 = vector.shape_cast %59 : vector<16xf32> to vector<16x1xf32>
    %61 = tpu.reciprocal %60 {approx = true} : vector<16x1xf32> -> vector<16x1xf32>
    %62 = vector.broadcast %61 : vector<16x1xf32> to vector<16x16xf32>
    %63 = arith.mulf %58, %62 : vector<16x16xf32>
    %64 = arith.mulf %63, %5 : vector<16x16xf32>
    %cst_37 = arith.constant dense<0.000000e+00> : vector<16x128xf32>
    %65 = tpu.matmul %64, %47, %cst_37 {dimension_numbers = #tpu.dot_dimension_numbers<[1], [0], [0], [1], [0, 0, 1, 1], [], []>} : vector<16x16xf32>, vector<16x128xf32>, vector<16x128xf32> -> vector<16x128xf32>
    %66 = arith.addf %44, %65 : vector<16x128xf32>
    %67 = vector.extract_strided_slice %43 {offsets = [0, 128], sizes = [16, 128], strides = [1, 1]} : vector<16x1536xf32> to vector<16x128xf32>
    %68 = vector.extract_strided_slice %43 {offsets = [0, 640], sizes = [16, 128], strides = [1, 1]} : vector<16x1536xf32> to vector<16x128xf32>
    %69 = vector.extract_strided_slice %43 {offsets = [0, 1152], sizes = [16, 128], strides = [1, 1]} : vector<16x1536xf32> to vector<16x128xf32>
    %cst_38 = arith.constant dense<0.000000e+00> : vector<16x16xf32>
    %70 = tpu.matmul %67, %68, %cst_38 {dimension_numbers = #tpu.dot_dimension_numbers<[1], [1], [0], [0], [0, 0, 1, 0], [], []>} : vector<16x128xf32>, vector<16x128xf32>, vector<16x16xf32> -> vector<16x16xf32>
    %c0_39 = arith.constant 0 : index
    %c1_40 = arith.constant 1 : index
    %c0_41 = arith.constant 0 : index
    %c0_42 = arith.constant 0 : index
    %71 = vector.load %arg2[%c0_39, %c1_40, %c0_41, %c0_42] : memref<1x6x16x16xf32, #tpu.memory_space<vmem>>, vector<1x1x16x16xf32>
    %72 = vector.shape_cast %71 : vector<1x1x16x16xf32> to vector<16x16xf32>
    %73 = arith.addf %70, %72 : vector<16x16xf32>
    %74 = arith.addf %73, %3 : vector<16x16xf32>
    %75 = arith.mulf %74, %10 : vector<16x16xf32>
    %cst_43 = arith.constant dense<0xFF800000> : vector<16xf32>
    %76 = vector.multi_reduction <maximumf>, %75, %cst_43 [1] : vector<16x16xf32> to vector<16xf32>
    %77 = vector.shape_cast %76 : vector<16xf32> to vector<16x1xf32>
    %78 = vector.broadcast %77 : vector<16x1xf32> to vector<16x16xf32>
    %79 = arith.subf %75, %78 : vector<16x16xf32>
    %80 = math.exp %79 : vector<16x16xf32>
    %cst_44 = arith.constant dense<0.000000e+00> : vector<16xf32>
    %81 = vector.multi_reduction <add>, %80, %cst_44 [1] : vector<16x16xf32> to vector<16xf32>
    %82 = vector.shape_cast %81 : vector<16xf32> to vector<16x1xf32>
    %83 = tpu.reciprocal %82 {approx = true} : vector<16x1xf32> -> vector<16x1xf32>
    %84 = vector.broadcast %83 : vector<16x1xf32> to vector<16x16xf32>
    %85 = arith.mulf %80, %84 : vector<16x16xf32>
    %86 = arith.mulf %85, %5 : vector<16x16xf32>
    %cst_45 = arith.constant dense<0.000000e+00> : vector<16x128xf32>
    %87 = tpu.matmul %86, %69, %cst_45 {dimension_numbers = #tpu.dot_dimension_numbers<[1], [0], [0], [1], [0, 0, 1, 1], [], []>} : vector<16x16xf32>, vector<16x128xf32>, vector<16x128xf32> -> vector<16x128xf32>
    %88 = arith.addf %66, %87 : vector<16x128xf32>
    %89 = vector.extract_strided_slice %43 {offsets = [0, 256], sizes = [16, 128], strides = [1, 1]} : vector<16x1536xf32> to vector<16x128xf32>
    %90 = vector.extract_strided_slice %43 {offsets = [0, 768], sizes = [16, 128], strides = [1, 1]} : vector<16x1536xf32> to vector<16x128xf32>
    %91 = vector.extract_strided_slice %43 {offsets = [0, 1280], sizes = [16, 128], strides = [1, 1]} : vector<16x1536xf32> to vector<16x128xf32>
    %cst_46 = arith.constant dense<0.000000e+00> : vector<16x16xf32>
    %92 = tpu.matmul %89, %90, %cst_46 {dimension_numbers = #tpu.dot_dimension_numbers<[1], [1], [0], [0], [0, 0, 1, 0], [], []>} : vector<16x128xf32>, vector<16x128xf32>, vector<16x16xf32> -> vector<16x16xf32>
    %c0_47 = arith.constant 0 : index
    %c2_48 = arith.constant 2 : index
    %c0_49 = arith.constant 0 : index
    %c0_50 = arith.constant 0 : index
    %93 = vector.load %arg2[%c0_47, %c2_48, %c0_49, %c0_50] : memref<1x6x16x16xf32, #tpu.memory_space<vmem>>, vector<1x1x16x16xf32>
    %94 = vector.shape_cast %93 : vector<1x1x16x16xf32> to vector<16x16xf32>
    %95 = arith.addf %92, %94 : vector<16x16xf32>
    %96 = arith.addf %95, %3 : vector<16x16xf32>
    %97 = arith.mulf %96, %10 : vector<16x16xf32>
    %cst_51 = arith.constant dense<0xFF800000> : vector<16xf32>
    %98 = vector.multi_reduction <maximumf>, %97, %cst_51 [1] : vector<16x16xf32> to vector<16xf32>
    %99 = vector.shape_cast %98 : vector<16xf32> to vector<16x1xf32>
    %100 = vector.broadcast %99 : vector<16x1xf32> to vector<16x16xf32>
    %101 = arith.subf %97, %100 : vector<16x16xf32>
    %102 = math.exp %101 : vector<16x16xf32>
    %cst_52 = arith.constant dense<0.000000e+00> : vector<16xf32>
    %103 = vector.multi_reduction <add>, %102, %cst_52 [1] : vector<16x16xf32> to vector<16xf32>
    %104 = vector.shape_cast %103 : vector<16xf32> to vector<16x1xf32>
    %105 = tpu.reciprocal %104 {approx = true} : vector<16x1xf32> -> vector<16x1xf32>
    %106 = vector.broadcast %105 : vector<16x1xf32> to vector<16x16xf32>
    %107 = arith.mulf %102, %106 : vector<16x16xf32>
    %108 = arith.mulf %107, %5 : vector<16x16xf32>
    %cst_53 = arith.constant dense<0.000000e+00> : vector<16x128xf32>
    %109 = tpu.matmul %108, %91, %cst_53 {dimension_numbers = #tpu.dot_dimension_numbers<[1], [0], [0], [1], [0, 0, 1, 1], [], []>} : vector<16x16xf32>, vector<16x128xf32>, vector<16x128xf32> -> vector<16x128xf32>
    %110 = arith.addf %88, %109 : vector<16x128xf32>
    %111 = vector.extract_strided_slice %43 {offsets = [0, 384], sizes = [16, 128], strides = [1, 1]} : vector<16x1536xf32> to vector<16x128xf32>
    %112 = vector.extract_strided_slice %43 {offsets = [0, 896], sizes = [16, 128], strides = [1, 1]} : vector<16x1536xf32> to vector<16x128xf32>
    %113 = vector.extract_strided_slice %43 {offsets = [0, 1408], sizes = [16, 128], strides = [1, 1]} : vector<16x1536xf32> to vector<16x128xf32>
    %cst_54 = arith.constant dense<0.000000e+00> : vector<16x16xf32>
    %114 = tpu.matmul %111, %112, %cst_54 {dimension_numbers = #tpu.dot_dimension_numbers<[1], [1], [0], [0], [0, 0, 1, 0], [], []>} : vector<16x128xf32>, vector<16x128xf32>, vector<16x16xf32> -> vector<16x16xf32>
    %c0_55 = arith.constant 0 : index
    %c3_56 = arith.constant 3 : index
    %c0_57 = arith.constant 0 : index
    %c0_58 = arith.constant 0 : index
    %115 = vector.load %arg2[%c0_55, %c3_56, %c0_57, %c0_58] : memref<1x6x16x16xf32, #tpu.memory_space<vmem>>, vector<1x1x16x16xf32>
    %116 = vector.shape_cast %115 : vector<1x1x16x16xf32> to vector<16x16xf32>
    %117 = arith.addf %114, %116 : vector<16x16xf32>
    %118 = arith.addf %117, %3 : vector<16x16xf32>
    %119 = arith.mulf %118, %10 : vector<16x16xf32>
    %cst_59 = arith.constant dense<0xFF800000> : vector<16xf32>
    %120 = vector.multi_reduction <maximumf>, %119, %cst_59 [1] : vector<16x16xf32> to vector<16xf32>
    %121 = vector.shape_cast %120 : vector<16xf32> to vector<16x1xf32>
    %122 = vector.broadcast %121 : vector<16x1xf32> to vector<16x16xf32>
    %123 = arith.subf %119, %122 : vector<16x16xf32>
    %124 = math.exp %123 : vector<16x16xf32>
    %cst_60 = arith.constant dense<0.000000e+00> : vector<16xf32>
    %125 = vector.multi_reduction <add>, %124, %cst_60 [1] : vector<16x16xf32> to vector<16xf32>
    %126 = vector.shape_cast %125 : vector<16xf32> to vector<16x1xf32>
    %127 = tpu.reciprocal %126 {approx = true} : vector<16x1xf32> -> vector<16x1xf32>
    %128 = vector.broadcast %127 : vector<16x1xf32> to vector<16x16xf32>
    %129 = arith.mulf %124, %128 : vector<16x16xf32>
    %130 = arith.mulf %129, %5 : vector<16x16xf32>
    %cst_61 = arith.constant dense<0.000000e+00> : vector<16x128xf32>
    %131 = tpu.matmul %130, %113, %cst_61 {dimension_numbers = #tpu.dot_dimension_numbers<[1], [0], [0], [1], [0, 0, 1, 1], [], []>} : vector<16x16xf32>, vector<16x128xf32>, vector<16x128xf32> -> vector<16x128xf32>
    %132 = arith.addf %110, %131 : vector<16x128xf32>
    %133 = vector.extract_strided_slice %132 {offsets = [0, 0], sizes = [16, 32], strides = [1, 1]} : vector<16x128xf32> to vector<16x32xf32>
    %134 = vector.broadcast %15 : vector<1x32xf32> to vector<16x32xf32>
    %135 = arith.addf %133, %134 : vector<16x32xf32>
    %136 = arith.addf %135, %1 : vector<16x32xf32>
    %cst_62 = arith.constant dense<0.000000e+00> : vector<16xf32>
    %137 = vector.multi_reduction <add>, %136, %cst_62 [1] : vector<16x32xf32> to vector<16xf32>
    %138 = vector.shape_cast %137 : vector<16xf32> to vector<16x1xf32>
    %cst_63 = arith.constant 3.200000e+01 : f32
    %139 = vector.broadcast %cst_63 : f32 to vector<16x1xf32>
    %140 = arith.divf %138, %139 : vector<16x1xf32>
    %141 = vector.broadcast %140 : vector<16x1xf32> to vector<16x32xf32>
    %142 = arith.subf %136, %141 : vector<16x32xf32>
    %143 = arith.mulf %142, %142 : vector<16x32xf32>
    %cst_64 = arith.constant dense<0.000000e+00> : vector<16xf32>
    %144 = vector.multi_reduction <add>, %143, %cst_64 [1] : vector<16x32xf32> to vector<16xf32>
    %145 = vector.shape_cast %144 : vector<16xf32> to vector<16x1xf32>
    %cst_65 = arith.constant 3.200000e+01 : f32
    %146 = vector.broadcast %cst_65 : f32 to vector<16x1xf32>
    %147 = arith.divf %145, %146 : vector<16x1xf32>
    %148 = vector.broadcast %140 : vector<16x1xf32> to vector<16x32xf32>
    %149 = arith.subf %136, %148 : vector<16x32xf32>
    %cst_66 = arith.constant 9.99999974E-6 : f32
    %150 = vector.broadcast %cst_66 : f32 to vector<16x1xf32>
    %151 = arith.addf %147, %150 : vector<16x1xf32>
    %152 = math.rsqrt %151 : vector<16x1xf32>
    %153 = vector.broadcast %152 : vector<16x1xf32> to vector<16x32xf32>
    %154 = arith.mulf %149, %153 : vector<16x32xf32>
    %155 = vector.broadcast %13 : vector<1x32xf32> to vector<16x32xf32>
    %156 = arith.mulf %154, %155 : vector<16x32xf32>
    %157 = vector.broadcast %14 : vector<1x32xf32> to vector<16x32xf32>
    %158 = arith.addf %156, %157 : vector<16x32xf32>
    %c0_67 = arith.constant 0 : index
    %c0_68 = arith.constant 0 : index
    %159 = vector.load %arg5[%c0_67, %c0_68] : memref<32x32xf32, #tpu.memory_space<vmem>>, vector<32x32xf32>
    %cst_69 = arith.constant dense<0.000000e+00> : vector<16x32xf32>
    %160 = tpu.matmul %158, %159, %cst_69 {dimension_numbers = #tpu.dot_dimension_numbers<[1], [0], [0], [1], [0, 0, 1, 1], [], []>} : vector<16x32xf32>, vector<32x32xf32>, vector<16x32xf32> -> vector<16x32xf32>
    %161 = vector.broadcast %16 : vector<1x32xf32> to vector<16x32xf32>
    %162 = arith.addf %160, %161 : vector<16x32xf32>
    %163 = arith.addf %162, %136 : vector<16x32xf32>
    %c0_70 = arith.constant 0 : index
    %c0_71 = arith.constant 0 : index
    %c0_72 = arith.constant 0 : index
    %164 = vector.load %arg7[%c0_70, %c0_71, %c0_72] : memref<1x16x32xf32, #tpu.memory_space<vmem>>, vector<1x16x32xf32>
    %165 = vector.shape_cast %164 : vector<1x16x32xf32> to vector<16x32xf32>
    %166 = vector.shape_cast %163 : vector<16x32xf32> to vector<1x16x32xf32>
    tpu.vector_store %arg7[%c0_70, %c0_71, %c0_72], %166 {strides = array<i32>} : memref<1x16x32xf32, #tpu.memory_space<vmem>>, vector<1x16x32xf32>,
    return
  }
  func.func @transform_0(%arg0: i32) -> (i32, i32, i32) {
    %c0_i32 = arith.constant 0 : i32
    %c0_i32_0 = arith.constant 0 : i32
    %c0_i32_1 = arith.constant 0 : i32
    return %arg0, %c0_i32, %c0_i32_0 : i32, i32, i32
  }
  func.func @transform_1(%arg0: i32) -> (i32, i32, i32, i32) {
    %c0_i32 = arith.constant 0 : i32
    %c0_i32_0 = arith.constant 0 : i32
    %c0_i32_1 = arith.constant 0 : i32
    %c0_i32_2 = arith.constant 0 : i32
    return %arg0, %c0_i32, %c0_i32_0, %c0_i32_1 : i32, i32, i32, i32
  }
  func.func @transform_2(%arg0: i32) -> (i32, i32) {
    %c0_i32 = arith.constant 0 : i32
    %c0_i32_0 = arith.constant 0 : i32
    %c0_i32_1 = arith.constant 0 : i32
    return %c0_i32, %c0_i32_0 : i32, i32
  }
  func.func @transform_3(%arg0: i32) -> (i32, i32) {
    %c0_i32 = arith.constant 0 : i32
    %c0_i32_0 = arith.constant 0 : i32
    %c0_i32_1 = arith.constant 0 : i32
    return %c0_i32, %c0_i32_0 : i32, i32
  }
  func.func @transform_4(%arg0: i32) -> (i32, i32) {
    %c0_i32 = arith.constant 0 : i32
    %c0_i32_0 = arith.constant 0 : i32
    %c0_i32_1 = arith.constant 0 : i32
    return %c0_i32, %c0_i32_0 : i32, i32
  }
  func.func @transform_5(%arg0: i32) -> (i32, i32) {
    %c0_i32 = arith.constant 0 : i32
    %c0_i32_0 = arith.constant 0 : i32
    %c0_i32_1 = arith.constant 0 : i32
    return %c0_i32, %c0_i32_0 : i32, i32
  }
  func.func @transform_6(%arg0: i32) -> (i32, i32, i32) {
    %c0_i32 = arith.constant 0 : i32
    %c0_i32_0 = arith.constant 0 : i32
    %c0_i32_1 = arith.constant 0 : i32
    return %arg0, %c0_i32, %c0_i32_0 : i32, i32, i32
  }
}

</mosaic_0001>

<llo_original>
// kernel: graphormer_encoder_layer.1
$region0: #{graphormer_encoder_layer.1}
  #allocation0 [shape = 'u32[]', space=smem, size = 0x4, offset = 0x4, fixed_abs, tag = 'smem constant byte address 0x4 - core index']
  #allocation1 [shape = 'u32[72,128]{1,0:T(1,128)}', space=vmem, size = 0x9000, scoped, tag = 'internal scratch']
  %s0 = inlined_call_operand.vmem [shape: f32[4,16,32], index: 0, kind: input, shape index: {}]
  %s1 = inlined_call_operand.vmem [shape: f32[4,6,16,16], index: 1, kind: input, shape index: {}]
  %s2 = inlined_call_operand.vmem [shape: f32[32,1536], index: 2, kind: input, shape index: {}]
  %s3 = inlined_call_operand.vmem [shape: f32[1,1536], index: 3, kind: input, shape index: {}]
  %s4 = inlined_call_operand.vmem [shape: f32[32,32], index: 4, kind: input, shape index: {}]
  %s5 = inlined_call_operand.vmem [shape: f32[6,32], index: 5, kind: input, shape index: {}]
  %s6 = inlined_call_operand.hbm [shape: f32[4,16,32], index: 6, kind: output, shape index: {}]
  %s7 = sld [smem:[#allocation0]]
  $region57: #{graphormer_encoder_layer.1} parent=0
    _
  %s9 = ssub.s32 1, %s7
  %s10 = scalar_select 0, %s9, %s7
  $region1: #{graphormer_encoder_layer.1} parent=0
    #allocation2 [shape = 'u8[16384]{0}', space=vmem, size = 0x4000, scoped, tag = 'output window, operand 0']
    #allocation3 [shape = 's32[2]{0}', space=sflag, size = 0x8, scoped, tag = 'scoped memory for graphormer_encoder_layer.1']
    %11 = vsyncpa [#allocation3], 0
    %s12 = scalar_lea.sflag [#allocation3], 1
    %13 = vsyncpa %s12, 0
    loop: start=0, step=1, limit=6
    $region2: #{graphormer_encoder_layer.1} parent=1 // loop_pre_header
      _
    $region3: #{graphormer_encoder_layer.1} parent=1 // loop_header
      %s15 = sphi 0, %s19
      %p16 = scmp.ge.s32.totalorder %s15, 6
      %s25 = sphi 0, %s27
      %s28 = sphi 0, %s25
      %s29 = sphi 0, %s28
      %s45 = sphi 0, %s29
      %s51 = sphi 0, %s53
      %s54 = sphi 0, %s51
      %s55 = sphi 0, %s54
      %s71 = sphi 0, %s55
      %s75 = sphi 0, %s75
      %s77 = sphi 0, %s75
      %s78 = sphi 0, %s77
      %s92 = sphi 0, %s78
      %s96 = sphi 0, %s96
      %s98 = sphi 0, %s96
      %s99 = sphi 0, %s98
      %s113 = sphi 0, %s99
      %s117 = sphi 0, %s117
      %s119 = sphi 0, %s117
      %s120 = sphi 0, %s119
      %s134 = sphi 0, %s120
      %s138 = sphi 0, %s138
      %s140 = sphi 0, %s138
      %s141 = sphi 0, %s140
      %s155 = sphi 0, %s141
      %s161 = sphi 0, %s163
      %s164 = sphi 0, %s161
      %s165 = sphi 0, %s164
      %s181 = sphi 0, %s165
    $region4: #{graphormer_encoder_layer.1} parent=1 // loop_header_branch
      %18 = sbr.rel (%p16) target = $region8
    $region5: #{graphormer_encoder_layer.1} parent=1 // loop_body
      %s20 = ssub.s32 %s15, 1
      %s21 = ssub.s32 %s15, 2
      %s22 = sadd.s32 %s15, 1
      %s23 = ssub.s32 %s15, %s22
      %p24 = scmp.eq.s32.totalorder %s23, 0
      %s26 = sadd.s32 %s25, 1
      %s27 = scalar_select %p24, %s25, %s26
      %p30 = pneg %p24
      %p31 = scmp.eq.s32.totalorder %s15, 3
      %p32 = por %p30, %p31
      %p33 = scmp.ne.s32.totalorder %s25, %s28
      %p34 = scmp.eq.s32.totalorder %s15, 0
      %p35 = por %p33, %p34
      %p36 = scmp.ne.s32.totalorder %s25, %s28
      %p37 = scmp.eq.s32.totalorder %s20, 3
      %p38 = por %p36, %p37
      %p39 = scmp.ne.s32.totalorder %s28, %s29
      %p40 = scmp.eq.s32.totalorder %s20, 0
      %p41 = por %p39, %p40
      %p42 = scmp.ne.s32.totalorder %s28, %s29
      %p43 = scmp.eq.s32.totalorder %s21, 3
      %p44 = por %p42, %p43
      %p46 = scmp.ne.s32.totalorder %s29, %s45
      %p47 = scmp.eq.s32.totalorder %s21, 0
      %p48 = por %p46, %p47
      %s49 = ssub.s32 %s15, %s22
      %p50 = scmp.eq.s32.totalorder %s49, 0
      %s52 = sadd.s32 %s51, 1
      %s53 = scalar_select %p50, %s51, %s52
      %p56 = pneg %p50
      %p57 = scmp.eq.s32.totalorder %s15, 3
      %p58 = por %p56, %p57
      %p59 = scmp.ne.s32.totalorder %s51, %s54
      %p60 = scmp.eq.s32.totalorder %s15, 0
      %p61 = por %p59, %p60
      %p62 = scmp.ne.s32.totalorder %s51, %s54
      %p63 = scmp.eq.s32.totalorder %s20, 3
      %p64 = por %p62, %p63
      %p65 = scmp.ne.s32.totalorder %s54, %s55
      %p66 = scmp.eq.s32.totalorder %s20, 0
      %p67 = por %p65, %p66
      %p68 = scmp.ne.s32.totalorder %s54, %s55
      %p69 = scmp.eq.s32.totalorder %s21, 3
      %p70 = por %p68, %p69
      %p72 = scmp.ne.s32.totalorder %s55, %s71
      %p73 = scmp.eq.s32.totalorder %s21, 0
      %p74 = por %p72, %p73
      %s76 = sadd.s32 %s75, 1
      %p79 = scmp.eq.s32.totalorder %s15, 3
      %p80 = scmp.ne.s32.totalorder %s75, %s77
      %p81 = scmp.eq.s32.totalorder %s15, 0
      %p82 = por %p80, %p81
      %p83 = scmp.ne.s32.totalorder %s75, %s77
      %p84 = scmp.eq.s32.totalorder %s20, 3
      %p85 = por %p83, %p84
      %p86 = scmp.ne.s32.totalorder %s77, %s78
      %p87 = scmp.eq.s32.totalorder %s20, 0
      %p88 = por %p86, %p87
      %p89 = scmp.ne.s32.totalorder %s77, %s78
      %p90 = scmp.eq.s32.totalorder %s21, 3
      %p91 = por %p89, %p90
      %p93 = scmp.ne.s32.totalorder %s78, %s92
      %p94 = scmp.eq.s32.totalorder %s21, 0
      %p95 = por %p93, %p94
      %s97 = sadd.s32 %s96, 1
      %p100 = scmp.eq.s32.totalorder %s15, 3
      %p101 = scmp.ne.s32.totalorder %s96, %s98
      %p102 = scmp.eq.s32.totalorder %s15, 0
      %p103 = por %p101, %p102
      %p104 = scmp.ne.s32.totalorder %s96, %s98
      %p105 = scmp.eq.s32.totalorder %s20, 3
      %p106 = por %p104, %p105
      %p107 = scmp.ne.s32.totalorder %s98, %s99
      %p108 = scmp.eq.s32.totalorder %s20, 0
      %p109 = por %p107, %p108
      %p110 = scmp.ne.s32.totalorder %s98, %s99
      %p111 = scmp.eq.s32.totalorder %s21, 3
      %p112 = por %p110, %p111
      %p114 = scmp.ne.s32.totalorder %s99, %s113
      %p115 = scmp.eq.s32.totalorder %s21, 0
      %p116 = por %p114, %p115
      %s118 = sadd.s32 %s117, 1
      %p121 = scmp.eq.s32.totalorder %s15, 3
      %p122 = scmp.ne.s32.totalorder %s117, %s119
      %p123 = scmp.eq.s32.totalorder %s15, 0
      %p124 = por %p122, %p123
      %p125 = scmp.ne.s32.totalorder %s117, %s119
      %p126 = scmp.eq.s32.totalorder %s20, 3
      %p127 = por %p125, %p126
      %p128 = scmp.ne.s32.totalorder %s119, %s120
      %p129 = scmp.eq.s32.totalorder %s20, 0
      %p130 = por %p128, %p129
      %p131 = scmp.ne.s32.totalorder %s119, %s120
      %p132 = scmp.eq.s32.totalorder %s21, 3
      %p133 = por %p131, %p132
      %p135 = scmp.ne.s32.totalorder %s120, %s134
      %p136 = scmp.eq.s32.totalorder %s21, 0
      %p137 = por %p135, %p136
      %s139 = sadd.s32 %s138, 1
      %p142 = scmp.eq.s32.totalorder %s15, 3
      %p143 = scmp.ne.s32.totalorder %s138, %s140
      %p144 = scmp.eq.s32.totalorder %s15, 0
      %p145 = por %p143, %p144
      %p146 = scmp.ne.s32.totalorder %s138, %s140
      %p147 = scmp.eq.s32.totalorder %s20, 3
      %p148 = por %p146, %p147
      %p149 = scmp.ne.s32.totalorder %s140, %s141
      %p150 = scmp.eq.s32.totalorder %s20, 0
      %p151 = por %p149, %p150
      %p152 = scmp.ne.s32.totalorder %s140, %s141
      %p153 = scmp.eq.s32.totalorder %s21, 3
      %p154 = por %p152, %p153
      %p156 = scmp.ne.s32.totalorder %s141, %s155
      %p157 = scmp.eq.s32.totalorder %s21, 0
      %p158 = por %p156, %p157
      %s159 = ssub.s32 %s15, %s22
      %p160 = scmp.eq.s32.totalorder %s159, 0
      %s162 = sadd.s32 %s161, 1
      %s163 = scalar_select %p160, %s161, %s162
      %p166 = pneg %p160
      %p167 = scmp.eq.s32.totalorder %s15, 3
      %p168 = por %p166, %p167
      %p169 = scmp.ne.s32.totalorder %s161, %s164
      %p170 = scmp.eq.s32.totalorder %s15, 0
      %p171 = por %p169, %p170
      %p172 = scmp.ne.s32.totalorder %s161, %s164
      %p173 = scmp.eq.s32.totalorder %s20, 3
      %p174 = por %p172, %p173
      %p175 = scmp.ne.s32.totalorder %s164, %s165
      %p176 = scmp.eq.s32.totalorder %s20, 0
      %p177 = por %p175, %p176
      %p178 = scmp.ne.s32.totalorder %s164, %s165
      %p179 = scmp.eq.s32.totalorder %s21, 3
      %p180 = por %p178, %p179
      %p182 = scmp.ne.s32.totalorder %s165, %s181
      %p183 = scmp.eq.s32.totalorder %s21, 0
      %p184 = por %p182, %p183
      %p185 = scmp.le.s32.totalorder 1, %s15
      %p186 = scmp.lt.s32.totalorder %s15, 5
      %p187 = pnand %p185, %p186
      %p188 = pneg %p187
      // Predicated region
      $region9: #{graphormer_encoder_layer.1} parent=5 // pred_check
        _
      $region10: #{graphormer_encoder_layer.1} parent=5 // pred_check_branch
        %190 = sbr.rel (%p187) target = $region12
      $region11: #{graphormer_encoder_layer.1} parent=5 // pred_region
        %s191 = ssub.s32 %s15, 1
        // Predicated region
        $region13: #{graphormer_encoder_layer.1} parent=11 // pred_check
          %p192 = pneg %p88
        $region14: #{graphormer_encoder_layer.1} parent=11 // pred_check_branch
          %194 = sbr.rel (%p192) target = $region16
        $region15: #{graphormer_encoder_layer.1} parent=11 // pred_region
          _
        $region16: #{graphormer_encoder_layer.1} parent=11 // pred_fallthru
          _
        // Predicated region
        $region17: #{graphormer_encoder_layer.1} parent=11 // pred_check
          %p195 = pneg %p109
        $region18: #{graphormer_encoder_layer.1} parent=11 // pred_check_branch
          %197 = sbr.rel (%p195) target = $region20
        $region19: #{graphormer_encoder_layer.1} parent=11 // pred_region
          _
        $region20: #{graphormer_encoder_layer.1} parent=11 // pred_fallthru
          _
        // Predicated region
        $region21: #{graphormer_encoder_layer.1} parent=11 // pred_check
          %p198 = pneg %p130
        $region22: #{graphormer_encoder_layer.1} parent=11 // pred_check_branch
          %200 = sbr.rel (%p198) target = $region24
        $region23: #{graphormer_encoder_layer.1} parent=11 // pred_region
          _
        $region24: #{graphormer_encoder_layer.1} parent=11 // pred_fallthru
          _
        // Predicated region
        $region25: #{graphormer_encoder_layer.1} parent=11 // pred_check
          %p201 = pneg %p151
        $region26: #{graphormer_encoder_layer.1} parent=11 // pred_check_branch
          %203 = sbr.rel (%p201) target = $region28
        $region27: #{graphormer_encoder_layer.1} parent=11 // pred_region
          _
        $region28: #{graphormer_encoder_layer.1} parent=11 // pred_fallthru
          _
      $region12: #{graphormer_encoder_layer.1} parent=5 // pred_fallthru
        _
      %p204 = scmp.lt.s32.totalorder %s15, 4
      // Predicated region
      $region29: #{graphormer_encoder_layer.1} parent=5 // pred_check
        %p205 = pneg %p204
      $region30: #{graphormer_encoder_layer.1} parent=5 // pred_check_branch
        %207 = sbr.rel (%p205) target = $region32
      $region31: #{graphormer_encoder_layer.1} parent=5 // pred_region
        // Predicated region
        $region33: #{graphormer_encoder_layer.1} parent=31 // pred_check
          %p208 = pneg %p35
        $region34: #{graphormer_encoder_layer.1} parent=31 // pred_check_branch
          %210 = sbr.rel (%p208) target = $region36
        $region35: #{graphormer_encoder_layer.1} parent=31 // pred_region
          %p211 = scmp.lt.s32.totalorder %s15, 3
          %s212 = scalar_select %p211, %s15, 3
          %s213 = smul.addr %s212, 2
          %s214 = smul.addr %s213, 8
          %s215 = scalar_lea.vmem %s0, %s214
        $region36: #{graphormer_encoder_layer.1} parent=31 // pred_fallthru
          _
        // Predicated region
        $region37: #{graphormer_encoder_layer.1} parent=31 // pred_check
          %p216 = pneg %p61
        $region38: #{graphormer_encoder_layer.1} parent=31 // pred_check_branch
          %218 = sbr.rel (%p216) target = $region40
        $region39: #{graphormer_encoder_layer.1} parent=31 // pred_region
          %p219 = scmp.lt.s32.totalorder %s15, 3
          %s220 = scalar_select %p219, %s15, 3
          %s221 = smul.addr %s220, 12
          %s222 = smul.addr %s221, 8
          %s223 = scalar_lea.vmem %s1, %s222
        $region40: #{graphormer_encoder_layer.1} parent=31 // pred_fallthru
          _
      $region32: #{graphormer_encoder_layer.1} parent=5 // pred_fallthru
        _
      %p224 = scmp.le.s32.totalorder 1, %s15
      %p225 = scmp.lt.s32.totalorder %s15, 5
      %p226 = pnand %p224, %p225
      %p227 = pneg %p226
      // Predicated region
      $region41: #{graphormer_encoder_layer.1} parent=5 // pred_check
        _
      $region42: #{graphormer_encoder_layer.1} parent=5 // pred_check_branch
        %229 = sbr.rel (%p226) target = $region44
      $region43: #{graphormer_encoder_layer.1} parent=5 // pred_region
        %s230 = ssub.s32 %s15, 1
        %p231 = scmp.lt.s32.totalorder %s20, 3
        %s232 = scalar_select %p231, %s20, 3
        %s233 = smul.addr %s232, 2
        %s234 = smul.addr %s233, 8
        %s235 = scalar_lea.vmem %s0, %s234
        %p236 = pneg %p41
        %p237 = pneg %p38
        %p238 = scmp.lt.s32.totalorder %s20, 3
        %s239 = scalar_select %p238, %s20, 3
        %s240 = smul.addr %s239, 12
        %s241 = smul.addr %s240, 8
        %s242 = scalar_lea.vmem %s1, %s241
        %p243 = pneg %p67
        %p244 = pneg %p64
        %p245 = pneg %p88
        %p246 = pneg %p85
        %p247 = pneg %p109
        %p248 = pneg %p106
        %p249 = pneg %p130
        %p250 = pneg %p127
        %p251 = pneg %p151
        %p252 = pneg %p148
        %p253 = pneg %p177
        %p254 = pneg %p174
        %s255 = sand.u32 %s164, 1
        %s256 = scalar_lea.sflag [#allocation3], %s255
        %s257 = sand.u32 %s164, 1
        %s258 = smul.addr %s257, 16
        %s259 = scalar_lea.vmem [#allocation2], %s258
        %p260 = scmp.lt.s32.totalorder %s20, 3
        %s261 = scalar_select %p260, %s20, 3
        %s262 = smul.addr %s261, 2
        %s263 = smul.addr %s262, 8
        %s264 = scalar_lea.vmem %s0, %s263
        %p265 = scmp.lt.s32.totalorder %s20, 3
        %s266 = scalar_select %p265, %s20, 3
        %s267 = smul.addr %s266, 12
        %s268 = smul.addr %s267, 8
        %s269 = scalar_lea.vmem %s1, %s268
        %v270 = vld [vmem:[%s264] sm:$0xff]
        %v271 = vld [vmem:[%s264 + $0x8] sm:$0xff]
        %s272 = scalar_lea.vmem %s269, 64
        %v273 = vld [vmem:[%s272] sm:$0xff]
        %v274 = vld [vmem:[%s272 + $0x8] sm:$0xff]
        %s275 = scalar_lea.vmem %s269, 80
        %v276 = vld [vmem:[%s275] sm:$0xff]
        %v277 = vld [vmem:[%s275 + $0x8] sm:$0xff]
        %vm278 = vcmp.eq.f32.partialorder %v276, 1.0
        %vm279 = vcmp.eq.f32.partialorder %v277, 1.0
        %v280 = vsel %vm278, 1.0, -1000000.0
        %v281 = vsel %vm279, 1.0, -1000000.0
        %v282 = vld [vmem:[%s5] sm:$0x1]
        %v283 = vld [vmem:[%s5 + $0x1] sm:$0x1]
        %v284 = vld [vmem:[%s5 + $0x2] sm:$0x1]
        %v285 = vld [vmem:[%s5 + $0x3] sm:$0x1]
        %v286 = vld [vmem:[%s5 + $0x4] sm:$0x1]
        %v287 = vld [vmem:[%s5 + $0x5] sm:$0x1]
        %vm288 = vcmask 261120
        %v289 = vsel %vm288, %v270, 0.0
        %290 = vadd.xlane.f32.xlu0 %v289
        %v291 = vpop.xlane.xlu0 %290
        %v292 = vsel %vm288, %v271, 0.0
        %293 = vadd.xlane.f32.xlu0 %v292
        %v294 = vpop.xlane.xlu0 %293
        %v295 = vrcp.pop 32.0
        %v296 = vmul.f32 32.0, %v295
        %v297 = vsub.f32 1.0, %v296
        %v298 = vmul.f32 %v295, %v297
        %v299 = vadd.f32 %v295, %v298
        %vm300 = vweird.f32 %v295
        %v301 = vsel %vm300, %v295, %v299
        %v302 = vmul.f32 %v291, %v301
        %v303 = vmul.f32 %v294, %v301
        %v304 = vsub.f32 %v270, %v302
        %v305 = vsub.f32 %v271, %v303
        %v306 = vmul.f32 %v304, %v304
        %v307 = vmul.f32 %v305, %v305
        %v308 = vsel %vm288, %v306, 0.0
        %309 = vadd.xlane.f32.xlu0 %v308
        %v310 = vpop.xlane.xlu0 %309
        %v311 = vsel %vm288, %v307, 0.0
        %312 = vadd.xlane.f32.xlu0 %v311
        %v313 = vpop.xlane.xlu0 %312
        %v314 = vmul.f32 %v310, %v301
        %v315 = vmul.f32 %v313, %v301
        %v316 = vadd.f32 %v314, 1e-05
        %v317 = vadd.f32 %v315, 1e-05
        %v318 = vrsqrt.pop %v316
        %v319 = vmul.f32 %v318, %v316
        %v320 = vmul.f32 %v319, %v318
        %v321 = vmul.f32 0.5, %v320
        %v322 = vsub.f32 1.5, %v321
        %v323 = vmul.f32 %v318, %v322
        %vm324 = vweird.f32 %v316
        %vm325 = vweird.f32 %v318
        %vm326 = vmor %vm324, %vm325
        %v327 = vsel %vm326, %v318, %v323
        %v328 = vrsqrt.pop %v317
        %v329 = vmul.f32 %v328, %v317
        %v330 = vmul.f32 %v329, %v328
        %v331 = vmul.f32 0.5, %v330
        %v332 = vsub.f32 1.5, %v331
        %v333 = vmul.f32 %v328, %v332
        %vm334 = vweird.f32 %v317
        %vm335 = vweird.f32 %v328
        %vm336 = vmor %vm334, %vm335
        %v337 = vsel %vm336, %v328, %v333
        %v338 = vmul.f32 %v304, %v327
        %v339 = vmul.f32 %v305, %v337
        %v340 = vperm.slane %v282, 0
        %v341 = vmul.f32 %v338, %v340
        %v342 = vmul.f32 %v339, %v340
        %v343 = vperm.slane %v283, 0
        %v344 = vadd.f32 %v341, %v343
        %v345 = vadd.f32 %v342, %v343
        %v346 = vld [vmem:[%s2] sm:$0xff]
        %v347 = vld [vmem:[%s2 + $0x8] sm:$0xff]
        %v348 = vld [vmem:[%s2 + $0x10] sm:$0xff]
        %v349 = vld [vmem:[%s2 + $0x18] sm:$0xff]
        %v350 = vld [vmem:[%s2 + $0x20] sm:$0xff]
        %v351 = vld [vmem:[%s2 + $0x28] sm:$0xff]
        %v352 = vld [vmem:[%s2 + $0x30] sm:$0xff]
        %v353 = vld [vmem:[%s2 + $0x38] sm:$0xff]
        %v354 = vld [vmem:[%s2 + $0x40] sm:$0xff]
        %v355 = vld [vmem:[%s2 + $0x48] sm:$0xff]
        %v356 = vld [vmem:[%s2 + $0x50] sm:$0xff]
        %v357 = vld [vmem:[%s2 + $0x58] sm:$0xff]
        %v358 = vld [vmem:[%s2 + $0x60] sm:$0xff]
        %v359 = vld [vmem:[%s2 + $0x68] sm:$0xff]
        %v360 = vld [vmem:[%s2 + $0x70] sm:$0xff]
        %v361 = vld [vmem:[%s2 + $0x78] sm:$0xff]
        %v362 = vld [vmem:[%s2 + $0x80] sm:$0xff]
        %v363 = vld [vmem:[%s2 + $0x88] sm:$0xff]
        %v364 = vld [vmem:[%s2 + $0x90] sm:$0xff]
        %v365 = vld [vmem:[%s2 + $0x98] sm:$0xff]
        %v366 = vld [vmem:[%s2 + $0xa0] sm:$0xff]
        %v367 = vld [vmem:[%s2 + $0xa8] sm:$0xff]
        %v368 = vld [vmem:[%s2 + $0xb0] sm:$0xff]
        %v369 = vld [vmem:[%s2 + $0xb8] sm:$0xff]
        %v370 = vld [vmem:[%s2 + $0xc0] sm:$0xff]
        %v371 = vld [vmem:[%s2 + $0xc8] sm:$0xff]
        %v372 = vld [vmem:[%s2 + $0xd0] sm:$0xff]
        %v373 = vld [vmem:[%s2 + $0xd8] sm:$0xff]
        %v374 = vld [vmem:[%s2 + $0xe0] sm:$0xff]
        %v375 = vld [vmem:[%s2 + $0xe8] sm:$0xff]
        %v376 = vld [vmem:[%s2 + $0xf0] sm:$0xff]
        %v377 = vld [vmem:[%s2 + $0xf8] sm:$0xff]
        %v378 = vld [vmem:[%s2 + $0x100] sm:$0xff]
        %v379 = vld [vmem:[%s2 + $0x108] sm:$0xff]
        %v380 = vld [vmem:[%s2 + $0x110] sm:$0xff]
        %v381 = vld [vmem:[%s2 + $0x118] sm:$0xff]
        %v382 = vld [vmem:[%s2 + $0x120] sm:$0xff]
        %v383 = vld [vmem:[%s2 + $0x128] sm:$0xff]
        %v384 = vld [vmem:[%s2 + $0x130] sm:$0xff]
        %v385 = vld [vmem:[%s2 + $0x138] sm:$0xff]
        %v386 = vld [vmem:[%s2 + $0x140] sm:$0xff]
        %v387 = vld [vmem:[%s2 + $0x148] sm:$0xff]
        %v388 = vld [vmem:[%s2 + $0x150] sm:$0xff]
        %v389 = vld [vmem:[%s2 + $0x158] sm:$0xff]
        %v390 = vld [vmem:[%s2 + $0x160] sm:$0xff]
        %v391 = vld [vmem:[%s2 + $0x168] sm:$0xff]
        %v392 = vld [vmem:[%s2 + $0x170] sm:$0xff]
        %v393 = vld [vmem:[%s2 + $0x178] sm:$0xff]
        %v394 = vld [vmem:[%s3] sm:$0xff]
        %v395 = vld [vmem:[%s3 + $0x8] sm:$0xf]
        %v398 = vperm.slane %v394, 0
        %v399 = vperm.slane %v394, 1
        %v400 = vperm.slane %v394, 2
        %v401 = vperm.slane %v394, 3
        %v402 = vperm.slane %v394, 4
        %v403 = vperm.slane %v394, 5
        %v404 = vperm.slane %v394, 6
        %v405 = vperm.slane %v394, 7
        %v406 = vperm.slane %v395, 0
        %v407 = vperm.slane %v395, 1
        %v408 = vperm.slane %v395, 2
        %v409 = vperm.slane %v395, 3
        %v423 = vsel %vm288, %v344, 0
        %v426 = vsel %vm288, %v345, 0
        %428 = vmatpush.msra.mxu0 0.0
        %429 = vmatpush.msra.mxu0 0.0
        %430 = vmatpush.msra.mxu0 0.0
        %431 = vmatpush.msra.mxu0 0.0
        %432 = vmatpush.msra.mxu0 0.0
        %433 = vmatpush.msra.mxu0 0.0
        %434 = vmatpush.msra.mxu0 0.0
        %435 = vmatpush.msra.mxu0 0.0
        %436 = vmatpush.msra.mxu0 0.0
        %437 = vmatpush.msra.mxu0 0.0
        %438 = vmatpush.msra.mxu0 0.0
        %439 = vmatpush.msra.mxu0 0.0
        %440 = vmatpush.msra.mxu0 %v382
        %441 = vmatpush.msra.mxu0 %v370
        %442 = vmatpush.msra.mxu0 %v358
        %443 = vmatpush.msra.mxu0 %v346
        %444 = vmatmul.f32.gmra.mxu0 %v423
        %v445 = vpop.f32.mrf.mxu0
        %v446 = vadd.f32 %v398, %v445
        %447 = vmatmul.f32.gmra.mxu0 %v426
        %v448 = vpop.f32.mrf.mxu0
        %v449 = vadd.f32 %v398, %v448
        %450 = vdwg.mxu0
        %451 = vmatpush.msra.mxu0 0.0
        %452 = vmatpush.msra.mxu0 0.0
        %453 = vmatpush.msra.mxu0 0.0
        %454 = vmatpush.msra.mxu0 0.0
        %455 = vmatpush.msra.mxu0 0.0
        %456 = vmatpush.msra.mxu0 0.0
        %457 = vmatpush.msra.mxu0 0.0
        %458 = vmatpush.msra.mxu0 0.0
        %459 = vmatpush.msra.mxu0 0.0
        %460 = vmatpush.msra.mxu0 0.0
        %461 = vmatpush.msra.mxu0 0.0
        %462 = vmatpush.msra.mxu0 0.0
        %463 = vmatpush.msra.mxu0 %v383
        %464 = vmatpush.msra.mxu0 %v371
        %465 = vmatpush.msra.mxu0 %v359
        %466 = vmatpush.msra.mxu0 %v347
        %467 = vmatmul.f32.gmra.mxu0 %v423
        %v468 = vpop.f32.mrf.mxu0
        %v469 = vadd.f32 %v399, %v468
        %470 = vmatmul.f32.gmra.mxu0 %v426
        %v471 = vpop.f32.mrf.mxu0
        %v472 = vadd.f32 %v399, %v471
        %473 = vdwg.mxu0
        %474 = vmatpush.msra.mxu0 0.0
        %475 = vmatpush.msra.mxu0 0.0
        %476 = vmatpush.msra.mxu0 0.0
        %477 = vmatpush.msra.mxu0 0.0
        %478 = vmatpush.msra.mxu0 0.0
        %479 = vmatpush.msra.mxu0 0.0
        %480 = vmatpush.msra.mxu0 0.0
        %481 = vmatpush.msra.mxu0 0.0
        %482 = vmatpush.msra.mxu0 0.0
        %483 = vmatpush.msra.mxu0 0.0
        %484 = vmatpush.msra.mxu0 0.0
        %485 = vmatpush.msra.mxu0 0.0
        %486 = vmatpush.msra.mxu0 %v384
        %487 = vmatpush.msra.mxu0 %v372
        %488 = vmatpush.msra.mxu0 %v360
        %489 = vmatpush.msra.mxu0 %v348
        %490 = vmatmul.f32.gmra.mxu0 %v423
        %v491 = vpop.f32.mrf.mxu0
        %v492 = vadd.f32 %v400, %v491
        %493 = vmatmul.f32.gmra.mxu0 %v426
        %v494 = vpop.f32.mrf.mxu0
        %v495 = vadd.f32 %v400, %v494
        %496 = vdwg.mxu0
        %497 = vmatpush.msra.mxu0 0.0
        %498 = vmatpush.msra.mxu0 0.0
        %499 = vmatpush.msra.mxu0 0.0
        %500 = vmatpush.msra.mxu0 0.0
        %501 = vmatpush.msra.mxu0 0.0
        %502 = vmatpush.msra.mxu0 0.0
        %503 = vmatpush.msra.mxu0 0.0
        %504 = vmatpush.msra.mxu0 0.0
        %505 = vmatpush.msra.mxu0 0.0
        %506 = vmatpush.msra.mxu0 0.0
        %507 = vmatpush.msra.mxu0 0.0
        %508 = vmatpush.msra.mxu0 0.0
        %509 = vmatpush.msra.mxu0 %v385
        %510 = vmatpush.msra.mxu0 %v373
        %511 = vmatpush.msra.mxu0 %v361
        %512 = vmatpush.msra.mxu0 %v349
        %513 = vmatmul.f32.gmra.mxu0 %v423
        %v514 = vpop.f32.mrf.mxu0
        %v515 = vadd.f32 %v401, %v514
        %516 = vmatmul.f32.gmra.mxu0 %v426
        %v517 = vpop.f32.mrf.mxu0
        %v518 = vadd.f32 %v401, %v517
        %519 = vdwg.mxu0
        %520 = vmatpush.msra.mxu0 0.0
        %521 = vmatpush.msra.mxu0 0.0
        %522 = vmatpush.msra.mxu0 0.0
        %523 = vmatpush.msra.mxu0 0.0
        %524 = vmatpush.msra.mxu0 0.0
        %525 = vmatpush.msra.mxu0 0.0
        %526 = vmatpush.msra.mxu0 0.0
        %527 = vmatpush.msra.mxu0 0.0
        %528 = vmatpush.msra.mxu0 0.0
        %529 = vmatpush.msra.mxu0 0.0
        %530 = vmatpush.msra.mxu0 0.0
        %531 = vmatpush.msra.mxu0 0.0
        %532 = vmatpush.msra.mxu0 %v386
        %533 = vmatpush.msra.mxu0 %v374
        %534 = vmatpush.msra.mxu0 %v362
        %535 = vmatpush.msra.mxu0 %v350
        %536 = vmatmul.f32.gmra.mxu0 %v423
        %v537 = vpop.f32.mrf.mxu0
        %v538 = vadd.f32 %v402, %v537
        %539 = vmatmul.f32.gmra.mxu0 %v426
        %v540 = vpop.f32.mrf.mxu0
        %v541 = vadd.f32 %v402, %v540
        %542 = vdwg.mxu0
        %543 = vmatpush.msra.mxu0 0.0
        %544 = vmatpush.msra.mxu0 0.0
        %545 = vmatpush.msra.mxu0 0.0
        %546 = vmatpush.msra.mxu0 0.0
        %547 = vmatpush.msra.mxu0 0.0
        %548 = vmatpush.msra.mxu0 0.0
        %549 = vmatpush.msra.mxu0 0.0
        %550 = vmatpush.msra.mxu0 0.0
        %551 = vmatpush.msra.mxu0 0.0
        %552 = vmatpush.msra.mxu0 0.0
        %553 = vmatpush.msra.mxu0 0.0
        %554 = vmatpush.msra.mxu0 0.0
        %555 = vmatpush.msra.mxu0 %v387
        %556 = vmatpush.msra.mxu0 %v375
        %557 = vmatpush.msra.mxu0 %v363
        %558 = vmatpush.msra.mxu0 %v351
        %559 = vmatmul.f32.gmra.mxu0 %v423
        %v560 = vpop.f32.mrf.mxu0
        %v561 = vadd.f32 %v403, %v560
        %562 = vmatmul.f32.gmra.mxu0 %v426
        %v563 = vpop.f32.mrf.mxu0
        %v564 = vadd.f32 %v403, %v563
        %565 = vdwg.mxu0
        %566 = vmatpush.msra.mxu0 0.0
        %567 = vmatpush.msra.mxu0 0.0
        %568 = vmatpush.msra.mxu0 0.0
        %569 = vmatpush.msra.mxu0 0.0
        %570 = vmatpush.msra.mxu0 0.0
        %571 = vmatpush.msra.mxu0 0.0
        %572 = vmatpush.msra.mxu0 0.0
        %573 = vmatpush.msra.mxu0 0.0
        %574 = vmatpush.msra.mxu0 0.0
        %575 = vmatpush.msra.mxu0 0.0
        %576 = vmatpush.msra.mxu0 0.0
        %577 = vmatpush.msra.mxu0 0.0
        %578 = vmatpush.msra.mxu0 %v388
        %579 = vmatpush.msra.mxu0 %v376
        %580 = vmatpush.msra.mxu0 %v364
        %581 = vmatpush.msra.mxu0 %v352
        %582 = vmatmul.f32.gmra.mxu0 %v423
        %v583 = vpop.f32.mrf.mxu0
        %v584 = vadd.f32 %v404, %v583
        %585 = vmatmul.f32.gmra.mxu0 %v426
        %v586 = vpop.f32.mrf.mxu0
        %v587 = vadd.f32 %v404, %v586
        %588 = vdwg.mxu0
        %589 = vmatpush.msra.mxu0 0.0
        %590 = vmatpush.msra.mxu0 0.0
        %591 = vmatpush.msra.mxu0 0.0
        %592 = vmatpush.msra.mxu0 0.0
        %593 = vmatpush.msra.mxu0 0.0
        %594 = vmatpush.msra.mxu0 0.0
        %595 = vmatpush.msra.mxu0 0.0
        %596 = vmatpush.msra.mxu0 0.0
        %597 = vmatpush.msra.mxu0 0.0
        %598 = vmatpush.msra.mxu0 0.0
        %599 = vmatpush.msra.mxu0 0.0
        %600 = vmatpush.msra.mxu0 0.0
        %601 = vmatpush.msra.mxu0 %v389
        %602 = vmatpush.msra.mxu0 %v377
        %603 = vmatpush.msra.mxu0 %v365
        %604 = vmatpush.msra.mxu0 %v353
        %605 = vmatmul.f32.gmra.mxu0 %v423
        %v606 = vpop.f32.mrf.mxu0
        %v607 = vadd.f32 %v405, %v606
        %608 = vmatmul.f32.gmra.mxu0 %v426
        %v609 = vpop.f32.mrf.mxu0
        %v610 = vadd.f32 %v405, %v609
        %611 = vdwg.mxu0
        %612 = vmatpush.msra.mxu0 0.0
        %613 = vmatpush.msra.mxu0 0.0
        %614 = vmatpush.msra.mxu0 0.0
        %615 = vmatpush.msra.mxu0 0.0
        %616 = vmatpush.msra.mxu0 0.0
        %617 = vmatpush.msra.mxu0 0.0
        %618 = vmatpush.msra.mxu0 0.0
        %619 = vmatpush.msra.mxu0 0.0
        %620 = vmatpush.msra.mxu0 0.0
        %621 = vmatpush.msra.mxu0 0.0
        %622 = vmatpush.msra.mxu0 0.0
        %623 = vmatpush.msra.mxu0 0.0
        %624 = vmatpush.msra.mxu0 %v390
        %625 = vmatpush.msra.mxu0 %v378
        %626 = vmatpush.msra.mxu0 %v366
        %627 = vmatpush.msra.mxu0 %v354
        %628 = vmatmul.f32.gmra.mxu0 %v423
        %v629 = vpop.f32.mrf.mxu0
        %v630 = vadd.f32 %v406, %v629
        %631 = vmatmul.f32.gmra.mxu0 %v426
        %v632 = vpop.f32.mrf.mxu0
        %v633 = vadd.f32 %v406, %v632
        %634 = vdwg.mxu0
        %635 = vmatpush.msra.mxu0 0.0
        %636 = vmatpush.msra.mxu0 0.0
        %637 = vmatpush.msra.mxu0 0.0
        %638 = vmatpush.msra.mxu0 0.0
        %639 = vmatpush.msra.mxu0 0.0
        %640 = vmatpush.msra.mxu0 0.0
        %641 = vmatpush.msra.mxu0 0.0
        %642 = vmatpush.msra.mxu0 0.0
        %643 = vmatpush.msra.mxu0 0.0
        %644 = vmatpush.msra.mxu0 0.0
        %645 = vmatpush.msra.mxu0 0.0
        %646 = vmatpush.msra.mxu0 0.0
        %647 = vmatpush.msra.mxu0 %v391
        %648 = vmatpush.msra.mxu0 %v379
        %649 = vmatpush.msra.mxu0 %v367
        %650 = vmatpush.msra.mxu0 %v355
        %651 = vmatmul.f32.gmra.mxu0 %v423
        %v652 = vpop.f32.mrf.mxu0
        %v653 = vadd.f32 %v407, %v652
        %654 = vmatmul.f32.gmra.mxu0 %v426
        %v655 = vpop.f32.mrf.mxu0
        %v656 = vadd.f32 %v407, %v655
        %657 = vdwg.mxu0
        %658 = vmatpush.msra.mxu0 0.0
        %659 = vmatpush.msra.mxu0 0.0
        %660 = vmatpush.msra.mxu0 0.0
        %661 = vmatpush.msra.mxu0 0.0
        %662 = vmatpush.msra.mxu0 0.0
        %663 = vmatpush.msra.mxu0 0.0
        %664 = vmatpush.msra.mxu0 0.0
        %665 = vmatpush.msra.mxu0 0.0
        %666 = vmatpush.msra.mxu0 0.0
        %667 = vmatpush.msra.mxu0 0.0
        %668 = vmatpush.msra.mxu0 0.0
        %669 = vmatpush.msra.mxu0 0.0
        %670 = vmatpush.msra.mxu0 %v392
        %671 = vmatpush.msra.mxu0 %v380
        %672 = vmatpush.msra.mxu0 %v368
        %673 = vmatpush.msra.mxu0 %v356
        %674 = vmatmul.f32.gmra.mxu0 %v423
        %v675 = vpop.f32.mrf.mxu0
        %v676 = vadd.f32 %v408, %v675
        %677 = vmatmul.f32.gmra.mxu0 %v426
        %v678 = vpop.f32.mrf.mxu0
        %v679 = vadd.f32 %v408, %v678
        %680 = vdwg.mxu0
        %681 = vmatpush.msra.mxu0 0.0
        %682 = vmatpush.msra.mxu0 0.0
        %683 = vmatpush.msra.mxu0 0.0
        %684 = vmatpush.msra.mxu0 0.0
        %685 = vmatpush.msra.mxu0 0.0
        %686 = vmatpush.msra.mxu0 0.0
        %687 = vmatpush.msra.mxu0 0.0
        %688 = vmatpush.msra.mxu0 0.0
        %689 = vmatpush.msra.mxu0 0.0
        %690 = vmatpush.msra.mxu0 0.0
        %691 = vmatpush.msra.mxu0 0.0
        %692 = vmatpush.msra.mxu0 0.0
        %693 = vmatpush.msra.mxu0 %v393
        %694 = vmatpush.msra.mxu0 %v381
        %695 = vmatpush.msra.mxu0 %v369
        %696 = vmatpush.msra.mxu0 %v357
        %697 = vmatmul.f32.gmra.mxu0 %v423
        %v698 = vpop.f32.mrf.mxu0
        %v699 = vadd.f32 %v409, %v698
        %700 = vmatmul.f32.gmra.mxu0 %v426
        %v701 = vpop.f32.mrf.mxu0
        %v702 = vadd.f32 %v409, %v701
        %703 = vdwg.mxu0
        %v704 = vld [vmem:[%s269] sm:$0xff]
        %v705 = vld [vmem:[%s269 + $0x8] sm:$0xff]
        %706 = vmatpush.xpose.msra.mxu0 0.0
        %707 = vmatpush.xpose.msra.mxu0 0.0
        %708 = vmatpush.xpose.msra.mxu0 0.0
        %709 = vmatpush.xpose.msra.mxu0 0.0
        %710 = vmatpush.xpose.msra.mxu0 0.0
        %711 = vmatpush.xpose.msra.mxu0 0.0
        %712 = vmatpush.xpose.msra.mxu0 0.0
        %713 = vmatpush.xpose.msra.mxu0 0.0
        %714 = vmatpush.xpose.msra.mxu0 0.0
        %715 = vmatpush.xpose.msra.mxu0 0.0
        %716 = vmatpush.xpose.msra.mxu0 0.0
        %717 = vmatpush.xpose.msra.mxu0 0.0
        %718 = vmatpush.xpose.msra.mxu0 0.0
        %719 = vmatpush.xpose.msra.mxu0 0.0
        %720 = vmatpush.xpose.msra.mxu0 %v541
        %721 = vmatpush.xpose.msra.mxu0 %v538
        %722 = vmatmul.f32.gmra.mxu0 %v446
        %v723 = vpop.f32.mrf.mxu0
        %v724 = vadd.f32 %v704, %v723
        %725 = vmatmul.f32.gmra.mxu0 %v449
        %v726 = vpop.f32.mrf.mxu0
        %v727 = vadd.f32 %v705, %v726
        %728 = vdwg.mxu0
        %v729 = vadd.f32 %v724, %v273
        %v730 = vadd.f32 %v727, %v274
        %v731 = vmul.f32 %v729, %v280
        %v732 = vmul.f32 %v730, %v281
        %vm733 = vcmask 130048
        %v734 = vsel %vm733, %v731, -inf
        %735 = vmax.xlane.f32.xlu0 %v734
        %v736 = vpop.xlane.xlu0 %735
        %v737 = vsel %vm733, %v732, -inf
        %738 = vmax.xlane.f32.xlu0 %v737
        %v739 = vpop.xlane.xlu0 %738
        %v740 = vsub.f32 %v731, %v736
        %v741 = vsub.f32 %v732, %v739
        %v742 = vmul.f32 %v740, 1.442695
        %v743 = vpow.pop %v742
        %v744 = vmul.f32 %v741, 1.442695
        %v745 = vpow.pop %v744
        %v746 = vsel %vm733, %v743, 0.0
        %747 = vadd.xlane.f32.xlu0 %v746
        %v748 = vpop.xlane.xlu0 %747
        %v749 = vsel %vm733, %v745, 0.0
        %750 = vadd.xlane.f32.xlu0 %v749
        %v751 = vpop.xlane.xlu0 %750
        %v752 = vrcp.pop %v748
        %v753 = vrcp.pop %v751
        %v754 = vmul.f32 %v743, %v752
        %v755 = vmul.f32 %v745, %v753
        %v756 = vmul.f32 %v754, %v276
        %v757 = vmul.f32 %v755, %v277
        %s758 = scalar_lea.vmem %s269, 16
        %v759 = vld [vmem:[%s758] sm:$0xff]
        %v760 = vld [vmem:[%s758 + $0x8] sm:$0xff]
        %761 = vmatpush.xpose.msra.mxu0 0.0
        %762 = vmatpush.xpose.msra.mxu0 0.0
        %763 = vmatpush.xpose.msra.mxu0 0.0
        %764 = vmatpush.xpose.msra.mxu0 0.0
        %765 = vmatpush.xpose.msra.mxu0 0.0
        %766 = vmatpush.xpose.msra.mxu0 0.0
        %767 = vmatpush.xpose.msra.mxu0 0.0
        %768 = vmatpush.xpose.msra.mxu0 0.0
        %769 = vmatpush.xpose.msra.mxu0 0.0
        %770 = vmatpush.xpose.msra.mxu0 0.0
        %771 = vmatpush.xpose.msra.mxu0 0.0
        %772 = vmatpush.xpose.msra.mxu0 0.0
        %773 = vmatpush.xpose.msra.mxu0 0.0
        %774 = vmatpush.xpose.msra.mxu0 0.0
        %775 = vmatpush.xpose.msra.mxu0 %v564
        %776 = vmatpush.xpose.msra.mxu0 %v561
        %777 = vmatmul.f32.gmra.mxu0 %v469
        %v778 = vpop.f32.mrf.mxu0
        %v779 = vadd.f32 %v759, %v778
        %780 = vmatmul.f32.gmra.mxu0 %v472
        %v781 = vpop.f32.mrf.mxu0
        %v782 = vadd.f32 %v760, %v781
        %783 = vdwg.mxu0
        %v784 = vadd.f32 %v779, %v273
        %v785 = vadd.f32 %v782, %v274
        %v786 = vmul.f32 %v784, %v280
        %v787 = vmul.f32 %v785, %v281
        %v788 = vsel %vm733, %v786, -inf
        %789 = vmax.xlane.f32.xlu0 %v788
        %v790 = vpop.xlane.xlu0 %789
        %v791 = vsel %vm733, %v787, -inf
        %792 = vmax.xlane.f32.xlu0 %v791
        %v793 = vpop.xlane.xlu0 %792
        %v794 = vsub.f32 %v786, %v790
        %v795 = vsub.f32 %v787, %v793
        %v796 = vmul.f32 %v794, 1.442695
        %v797 = vpow.pop %v796
        %v798 = vmul.f32 %v795, 1.442695
        %v799 = vpow.pop %v798
        %v800 = vsel %vm733, %v797, 0.0
        %801 = vadd.xlane.f32.xlu0 %v800
        %v802 = vpop.xlane.xlu0 %801
        %v803 = vsel %vm733, %v799, 0.0
        %804 = vadd.xlane.f32.xlu0 %v803
        %v805 = vpop.xlane.xlu0 %804
        %v806 = vrcp.pop %v802
        %v807 = vrcp.pop %v805
        %v808 = vmul.f32 %v797, %v806
        %v809 = vmul.f32 %v799, %v807
        %v810 = vmul.f32 %v808, %v276
        %v811 = vmul.f32 %v809, %v277
        %v813 = vsel %vm733, %v810, 0
        %v816 = vsel %vm733, %v811, 0
        %818 = vmatpush.msra.mxu0 0.0
        %819 = vmatpush.msra.mxu0 0.0
        %820 = vmatpush.msra.mxu0 0.0
        %821 = vmatpush.msra.mxu0 0.0
        %822 = vmatpush.msra.mxu0 0.0
        %823 = vmatpush.msra.mxu0 0.0
        %824 = vmatpush.msra.mxu0 0.0
        %825 = vmatpush.msra.mxu0 0.0
        %826 = vmatpush.msra.mxu0 0.0
        %827 = vmatpush.msra.mxu0 0.0
        %828 = vmatpush.msra.mxu0 0.0
        %829 = vmatpush.msra.mxu0 0.0
        %830 = vmatpush.msra.mxu0 0.0
        %831 = vmatpush.msra.mxu0 0.0
        %832 = vmatpush.msra.mxu0 %v656
        %833 = vmatpush.msra.mxu0 %v653
        %834 = vmatmul.f32.gmra.mxu0 %v813
        %v835 = vpop.f32.mrf.mxu0
        %v836 = vadd.f32 0.0, %v835
        %837 = vmatmul.f32.gmra.mxu0 %v816
        %v838 = vpop.f32.mrf.mxu0
        %v839 = vadd.f32 0.0, %v838
        %840 = vdwg.mxu0
        %v842 = vsel %vm733, %v756, 0
        %v845 = vsel %vm733, %v757, 0
        %847 = vmatpush.msra.mxu0 0.0
        %848 = vmatpush.msra.mxu0 0.0
        %849 = vmatpush.msra.mxu0 0.0
        %850 = vmatpush.msra.mxu0 0.0
        %851 = vmatpush.msra.mxu0 0.0
        %852 = vmatpush.msra.mxu0 0.0
        %853 = vmatpush.msra.mxu0 0.0
        %854 = vmatpush.msra.mxu0 0.0
        %855 = vmatpush.msra.mxu0 0.0
        %856 = vmatpush.msra.mxu0 0.0
        %857 = vmatpush.msra.mxu0 0.0
        %858 = vmatpush.msra.mxu0 0.0
        %859 = vmatpush.msra.mxu0 0.0
        %860 = vmatpush.msra.mxu0 0.0
        %861 = vmatpush.msra.mxu0 %v633
        %862 = vmatpush.msra.mxu0 %v630
        %863 = vmatmul.f32.gmra.mxu0 %v842
        %v864 = vpop.f32.mrf.mxu0
        %v865 = vadd.f32 %v836, %v864
        %866 = vmatmul.f32.gmra.mxu0 %v845
        %v867 = vpop.f32.mrf.mxu0
        %v868 = vadd.f32 %v839, %v867
        %869 = vdwg.mxu0
        %s870 = scalar_lea.vmem %s269, 32
        %v871 = vld [vmem:[%s870] sm:$0xff]
        %v872 = vld [vmem:[%s870 + $0x8] sm:$0xff]
        %873 = vmatpush.xpose.msra.mxu0 0.0
        %874 = vmatpush.xpose.msra.mxu0 0.0
        %875 = vmatpush.xpose.msra.mxu0 0.0
        %876 = vmatpush.xpose.msra.mxu0 0.0
        %877 = vmatpush.xpose.msra.mxu0 0.0
        %878 = vmatpush.xpose.msra.mxu0 0.0
        %879 = vmatpush.xpose.msra.mxu0 0.0
        %880 = vmatpush.xpose.msra.mxu0 0.0
        %881 = vmatpush.xpose.msra.mxu0 0.0
        %882 = vmatpush.xpose.msra.mxu0 0.0
        %883 = vmatpush.xpose.msra.mxu0 0.0
        %884 = vmatpush.xpose.msra.mxu0 0.0
        %885 = vmatpush.xpose.msra.mxu0 0.0
        %886 = vmatpush.xpose.msra.mxu0 0.0
        %887 = vmatpush.xpose.msra.mxu0 %v587
        %888 = vmatpush.xpose.msra.mxu0 %v584
        %889 = vmatmul.f32.gmra.mxu0 %v492
        %v890 = vpop.f32.mrf.mxu0
        %v891 = vadd.f32 %v871, %v890
        %892 = vmatmul.f32.gmra.mxu0 %v495
        %v893 = vpop.f32.mrf.mxu0
        %v894 = vadd.f32 %v872, %v893
        %895 = vdwg.mxu0
        %v896 = vadd.f32 %v891, %v273
        %v897 = vadd.f32 %v894, %v274
        %v898 = vmul.f32 %v896, %v280
        %v899 = vmul.f32 %v897, %v281
        %v900 = vsel %vm733, %v898, -inf
        %901 = vmax.xlane.f32.xlu0 %v900
        %v902 = vpop.xlane.xlu0 %901
        %v903 = vsel %vm733, %v899, -inf
        %904 = vmax.xlane.f32.xlu0 %v903
        %v905 = vpop.xlane.xlu0 %904
        %v906 = vsub.f32 %v898, %v902
        %v907 = vsub.f32 %v899, %v905
        %v908 = vmul.f32 %v906, 1.442695
        %v909 = vpow.pop %v908
        %v910 = vmul.f32 %v907, 1.442695
        %v911 = vpow.pop %v910
        %v912 = vsel %vm733, %v909, 0.0
        %913 = vadd.xlane.f32.xlu0 %v912
        %v914 = vpop.xlane.xlu0 %913
        %v915 = vsel %vm733, %v911, 0.0
        %916 = vadd.xlane.f32.xlu0 %v915
        %v917 = vpop.xlane.xlu0 %916
        %v918 = vrcp.pop %v914
        %v919 = vrcp.pop %v917
        %v920 = vmul.f32 %v909, %v918
        %v921 = vmul.f32 %v911, %v919
        %v922 = vmul.f32 %v920, %v276
        %v923 = vmul.f32 %v921, %v277
        %v925 = vsel %vm733, %v922, 0
        %v928 = vsel %vm733, %v923, 0
        %930 = vmatpush.msra.mxu0 0.0
        %931 = vmatpush.msra.mxu0 0.0
        %932 = vmatpush.msra.mxu0 0.0
        %933 = vmatpush.msra.mxu0 0.0
        %934 = vmatpush.msra.mxu0 0.0
        %935 = vmatpush.msra.mxu0 0.0
        %936 = vmatpush.msra.mxu0 0.0
        %937 = vmatpush.msra.mxu0 0.0
        %938 = vmatpush.msra.mxu0 0.0
        %939 = vmatpush.msra.mxu0 0.0
        %940 = vmatpush.msra.mxu0 0.0
        %941 = vmatpush.msra.mxu0 0.0
        %942 = vmatpush.msra.mxu0 0.0
        %943 = vmatpush.msra.mxu0 0.0
        %944 = vmatpush.msra.mxu0 %v679
        %945 = vmatpush.msra.mxu0 %v676
        %946 = vmatmul.f32.gmra.mxu0 %v925
        %v947 = vpop.f32.mrf.mxu0
        %v948 = vadd.f32 0.0, %v947
        %949 = vmatmul.f32.gmra.mxu0 %v928
        %v950 = vpop.f32.mrf.mxu0
        %v951 = vadd.f32 0.0, %v950
        %952 = vdwg.mxu0
        %v953 = vadd.f32 %v865, %v948
        %v954 = vadd.f32 %v868, %v951
        %s955 = scalar_lea.vmem %s269, 48
        %v956 = vld [vmem:[%s955] sm:$0xff]
        %v957 = vld [vmem:[%s955 + $0x8] sm:$0xff]
        %958 = vmatpush.xpose.msra.mxu0 0.0
        %959 = vmatpush.xpose.msra.mxu0 0.0
        %960 = vmatpush.xpose.msra.mxu0 0.0
        %961 = vmatpush.xpose.msra.mxu0 0.0
        %962 = vmatpush.xpose.msra.mxu0 0.0
        %963 = vmatpush.xpose.msra.mxu0 0.0
        %964 = vmatpush.xpose.msra.mxu0 0.0
        %965 = vmatpush.xpose.msra.mxu0 0.0
        %966 = vmatpush.xpose.msra.mxu0 0.0
        %967 = vmatpush.xpose.msra.mxu0 0.0
        %968 = vmatpush.xpose.msra.mxu0 0.0
        %969 = vmatpush.xpose.msra.mxu0 0.0
        %970 = vmatpush.xpose.msra.mxu0 0.0
        %971 = vmatpush.xpose.msra.mxu0 0.0
        %972 = vmatpush.xpose.msra.mxu0 %v610
        %973 = vmatpush.xpose.msra.mxu0 %v607
        %974 = vmatmul.f32.gmra.mxu0 %v515
        %v975 = vpop.f32.mrf.mxu0
        %v976 = vadd.f32 %v956, %v975
        %977 = vmatmul.f32.gmra.mxu0 %v518
        %v978 = vpop.f32.mrf.mxu0
        %v979 = vadd.f32 %v957, %v978
        %980 = vdwg.mxu0
        %v981 = vadd.f32 %v976, %v273
        %v982 = vadd.f32 %v979, %v274
        %v983 = vmul.f32 %v981, %v280
        %v984 = vmul.f32 %v982, %v281
        %v985 = vsel %vm733, %v983, -inf
        %986 = vmax.xlane.f32.xlu0 %v985
        %v987 = vpop.xlane.xlu0 %986
        %v988 = vsel %vm733, %v984, -inf
        %989 = vmax.xlane.f32.xlu0 %v988
        %v990 = vpop.xlane.xlu0 %989
        %v991 = vsub.f32 %v983, %v987
        %v992 = vsub.f32 %v984, %v990
        %v993 = vmul.f32 %v991, 1.442695
        %v994 = vpow.pop %v993
        %v995 = vmul.f32 %v992, 1.442695
        %v996 = vpow.pop %v995
        %v997 = vsel %vm733, %v994, 0.0
        %998 = vadd.xlane.f32.xlu0 %v997
        %v999 = vpop.xlane.xlu0 %998
        %v1000 = vsel %vm733, %v996, 0.0
        %1001 = vadd.xlane.f32.xlu0 %v1000
        %v1002 = vpop.xlane.xlu0 %1001
        %v1003 = vrcp.pop %v999
        %v1004 = vrcp.pop %v1002
        %v1005 = vmul.f32 %v994, %v1003
        %v1006 = vmul.f32 %v996, %v1004
        %v1007 = vmul.f32 %v1005, %v276
        %v1008 = vmul.f32 %v1006, %v277
        %v1010 = vsel %vm733, %v1007, 0
        %v1013 = vsel %vm733, %v1008, 0
        %1015 = vmatpush.msra.mxu0 0.0
        %1016 = vmatpush.msra.mxu0 0.0
        %1017 = vmatpush.msra.mxu0 0.0
        %1018 = vmatpush.msra.mxu0 0.0
        %1019 = vmatpush.msra.mxu0 0.0
        %1020 = vmatpush.msra.mxu0 0.0
        %1021 = vmatpush.msra.mxu0 0.0
        %1022 = vmatpush.msra.mxu0 0.0
        %1023 = vmatpush.msra.mxu0 0.0
        %1024 = vmatpush.msra.mxu0 0.0
        %1025 = vmatpush.msra.mxu0 0.0
        %1026 = vmatpush.msra.mxu0 0.0
        %1027 = vmatpush.msra.mxu0 0.0
        %1028 = vmatpush.msra.mxu0 0.0
        %1029 = vmatpush.msra.mxu0 %v702
        %1030 = vmatpush.msra.mxu0 %v699
        %1031 = vmatmul.f32.gmra.mxu0 %v1010
        %v1032 = vpop.f32.mrf.mxu0
        %v1033 = vadd.f32 0.0, %v1032
        %1034 = vmatmul.f32.gmra.mxu0 %v1013
        %v1035 = vpop.f32.mrf.mxu0
        %v1036 = vadd.f32 0.0, %v1035
        %1037 = vdwg.mxu0
        %v1038 = vadd.f32 %v953, %v1033
        %v1039 = vadd.f32 %v954, %v1036
        %v1040 = vperm.slane %v286, 0
        %v1041 = vadd.f32 %v1038, %v1040
        %v1042 = vadd.f32 %v1039, %v1040
        %v1043 = vadd.f32 %v1041, %v270
        %v1044 = vadd.f32 %v1042, %v271
        %v1045 = vsel %vm288, %v1043, 0.0
        %1046 = vadd.xlane.f32.xlu0 %v1045
        %v1047 = vpop.xlane.xlu0 %1046
        %v1048 = vsel %vm288, %v1044, 0.0
        %1049 = vadd.xlane.f32.xlu0 %v1048
        %v1050 = vpop.xlane.xlu0 %1049
        %v1051 = vmul.f32 %v1047, %v301
        %v1052 = vmul.f32 %v1050, %v301
        %v1053 = vsub.f32 %v1043, %v1051
        %v1054 = vsub.f32 %v1044, %v1052
        %v1055 = vmul.f32 %v1053, %v1053
        %v1056 = vmul.f32 %v1054, %v1054
        %v1057 = vsel %vm288, %v1055, 0.0
        %1058 = vadd.xlane.f32.xlu0 %v1057
        %v1059 = vpop.xlane.xlu0 %1058
        %v1060 = vsel %vm288, %v1056, 0.0
        %1061 = vadd.xlane.f32.xlu0 %v1060
        %v1062 = vpop.xlane.xlu0 %1061
        %v1063 = vmul.f32 %v1059, %v301
        %v1064 = vmul.f32 %v1062, %v301
        %v1065 = vadd.f32 %v1063, 1e-05
        %v1066 = vadd.f32 %v1064, 1e-05
        %v1067 = vrsqrt.pop %v1065
        %v1068 = vmul.f32 %v1067, %v1065
        %v1069 = vmul.f32 %v1068, %v1067
        %v1070 = vmul.f32 0.5, %v1069
        %v1071 = vsub.f32 1.5, %v1070
        %v1072 = vmul.f32 %v1067, %v1071
        %vm1073 = vweird.f32 %v1065
        %vm1074 = vweird.f32 %v1067
        %vm1075 = vmor %vm1073, %vm1074
        %v1076 = vsel %vm1075, %v1067, %v1072
        %v1077 = vrsqrt.pop %v1066
        %v1078 = vmul.f32 %v1077, %v1066
        %v1079 = vmul.f32 %v1078, %v1077
        %v1080 = vmul.f32 0.5, %v1079
        %v1081 = vsub.f32 1.5, %v1080
        %v1082 = vmul.f32 %v1077, %v1081
        %vm1083 = vweird.f32 %v1066
        %vm1084 = vweird.f32 %v1077
        %vm1085 = vmor %vm1083, %vm1084
        %v1086 = vsel %vm1085, %v1077, %v1082
        %v1087 = vmul.f32 %v1053, %v1076
        %v1088 = vmul.f32 %v1054, %v1086
        %v1089 = vperm.slane %v284, 0
        %v1090 = vmul.f32 %v1087, %v1089
        %v1091 = vmul.f32 %v1088, %v1089
        %v1092 = vperm.slane %v285, 0
        %v1093 = vadd.f32 %v1090, %v1092
        %v1094 = vadd.f32 %v1091, %v1092
        %v1095 = vld [vmem:[%s4] sm:$0xff]
        %v1096 = vld [vmem:[%s4 + $0x8] sm:$0xff]
        %v1097 = vld [vmem:[%s4 + $0x10] sm:$0xff]
        %v1098 = vld [vmem:[%s4 + $0x18] sm:$0xff]
        %v1099 = vperm.slane %v287, 0
        %v1101 = vsel %vm288, %v1093, 0
        %v1104 = vsel %vm288, %v1094, 0
        %1106 = vmatpush.msra.mxu0 0.0
        %1107 = vmatpush.msra.mxu0 0.0
        %1108 = vmatpush.msra.mxu0 0.0
        %1109 = vmatpush.msra.mxu0 0.0
        %1110 = vmatpush.msra.mxu0 0.0
        %1111 = vmatpush.msra.mxu0 0.0
        %1112 = vmatpush.msra.mxu0 0.0
        %1113 = vmatpush.msra.mxu0 0.0
        %1114 = vmatpush.msra.mxu0 0.0
        %1115 = vmatpush.msra.mxu0 0.0
        %1116 = vmatpush.msra.mxu0 0.0
        %1117 = vmatpush.msra.mxu0 0.0
        %1118 = vmatpush.msra.mxu0 %v1098
        %1119 = vmatpush.msra.mxu0 %v1097
        %1120 = vmatpush.msra.mxu0 %v1096
        %1121 = vmatpush.msra.mxu0 %v1095
        %1122 = vmatmul.f32.gmra.mxu0 %v1101
        %v1123 = vpop.f32.mrf.mxu0
        %v1124 = vadd.f32 %v1099, %v1123
        %1125 = vmatmul.f32.gmra.mxu0 %v1104
        %v1126 = vpop.f32.mrf.mxu0
        %v1127 = vadd.f32 %v1099, %v1126
        %1128 = vdwg.mxu0
        %v1129 = vadd.f32 %v1124, %v1043
        %v1130 = vadd.f32 %v1127, %v1044
        %1131 = vst.msk [vmem:[%s259] sm:$0xff] %vm288, %v1129
        %1132 = vst.msk [vmem:[%s259 + $0x8] sm:$0xff] %vm288, %v1130
        %s1133 = sand.u32 %s164, 1
        %s1134 = scalar_lea.sflag [#allocation3], %s1133
        %s1135 = sand.u32 %s164, 1
        %s1136 = smul.addr %s1135, 16
        %s1137 = scalar_lea.vmem [#allocation2], %s1136
        // Predicated region
        $region45: #{graphormer_encoder_layer.1} parent=43 // pred_check
          %p1138 = pneg %p174
        $region46: #{graphormer_encoder_layer.1} parent=43 // pred_check_branch
          %1140 = sbr.rel (%p1138) target = $region48
        $region47: #{graphormer_encoder_layer.1} parent=43 // pred_region
          %1142 = vsyncadd %s1134, 0
          %s1143 = smul.addr %s20, 2
          %s1144 = smul.addr %s1143, 8
          %s1145 = scalar_lea.hbm %s6, %s1144
          %s1146 = sshll.u32 %s1137, 4
          %s1147 = int_to_ptr.vmem [resolvable:$true] %s1146
          %s1148 = sshll.u32 %s1145, 4
          %s1149 = int_to_ptr.hbm [resolvable:$true] %s1148
          %1154 = dma.vmem_to_hbm [thread:$0]  %s1147, 256, %s1149, %s1134, 128, 128, 8
        $region48: #{graphormer_encoder_layer.1} parent=43 // pred_fallthru
          _
      $region44: #{graphormer_encoder_layer.1} parent=5 // pred_fallthru
        _
      %p1155 = scmp.le.s32.totalorder 2, %s15
      // Predicated region
      $region49: #{graphormer_encoder_layer.1} parent=5 // pred_check
        %p1156 = pneg %p1155
      $region50: #{graphormer_encoder_layer.1} parent=5 // pred_check_branch
        %1158 = sbr.rel (%p1156) target = $region52
      $region51: #{graphormer_encoder_layer.1} parent=5 // pred_region
        %s1159 = ssub.s32 %s15, 2
        // Predicated region
        $region53: #{graphormer_encoder_layer.1} parent=51 // pred_check
          %p1160 = pneg %p180
        $region54: #{graphormer_encoder_layer.1} parent=51 // pred_check_branch
          %1162 = sbr.rel (%p1160) target = $region56
        $region55: #{graphormer_encoder_layer.1} parent=51 // pred_region
          %s1163 = sand.u32 %s165, 1
          %s1164 = scalar_lea.sflag [#allocation3], %s1163
          %s1165 = sand.u32 %s165, 1
          %s1166 = smul.addr %s1165, 16
          %s1167 = scalar_lea.vmem [#allocation2], %s1166
          %1169 = dma.done %s1164, 256
        $region56: #{graphormer_encoder_layer.1} parent=51 // pred_fallthru
          _
      $region52: #{graphormer_encoder_layer.1} parent=5 // pred_fallthru
        _
    $region6: #{graphormer_encoder_layer.1} parent=1 // loop_footer
      %s19 = sadd.s32 1, %s15
    $region7: #{graphormer_encoder_layer.1} parent=1 // loop_footer_branch
      %14 = sbr.rel target = $region3
    $region8: #{graphormer_encoder_layer.1} parent=1 // loop_exit
      _
    %1170 = vsyncpa [#allocation3], 1
    %s1171 = scalar_lea.sflag [#allocation3], 1
    %1172 = vsyncpa %s1171, 1

</llo_original>
